<compile_context>
chip_gen: v7x
topology: tpu7x:2x2x1
jax: 0.10.0
libtpu: 0.0.40
codegen_flags: <defaults>
</compile_context>

<pallas_src>
import functools

import numpy as np
import jax
import jax.numpy as jnp
from jax.experimental import pallas as pl
from jax.experimental.pallas import tpu as pltpu


def _round_up(x, m):
    return ((x + m - 1) // m) * m


def _cnn_text_kernel(emb_ref, wconv_ref, bconv_ref, mask_ref, fcw_ref, fcb_ref,
                     out_ref, *, Kmax):
    """Fused conv(K,D)+ReLU+max-over-time (all branches merged) + FC.

    emb_ref  : (Bt, L, D)      bf16  batch tile of embeddings
    wconv_ref: (Kmax, D, Cop)  bf16  per-tap weights, all branches packed into
                                     the Cop lane block; taps >= K_i and pad
                                     channels are zero
    bconv_ref: (1, Cop)        f32   conv biases (pad channels zero)
    mask_ref : (L, Cop)        f32   1.0 where time position t is valid for the
                                     channel's kernel size, else 0.0
    fcw_ref  : (Cop, Cp)       f32   FC weight (pad rows / cols zero)
    fcb_ref  : (1, Cp)         f32   FC bias (pad cols zero)
    out_ref  : (Bt, Cp)        f32   logits (lane-dense output block)
    """
    Bt, L, D = emb_ref.shape
    Cop = bconv_ref.shape[-1]
    BtL = Bt * L

    # Flatten (batch, time) into one sublane axis so everything below is a
    # plain 2-D (rows, lanes) op.  Tap-k alignment then becomes a sublane
    # rotate; rows that wrap across a batch boundary only land in time
    # positions that the validity mask zeroes out below.
    emb2 = emb_ref[...].reshape(BtL, D)                    # bf16, straight to MXU

    # Tap 0 initialises the accumulator directly (no zeros+add).
    acc = jax.lax.dot_general(
        emb2, wconv_ref[0],
        dimension_numbers=(((1,), (0,)), ((), ())),
        preferred_element_type=jnp.float32)                # (BtL, Cop) f32
    for k in range(1, Kmax):                               # static unroll over taps
        y = jax.lax.dot_general(
            emb2, wconv_ref[k],
            dimension_numbers=(((1,), (0,)), ((), ())),
            preferred_element_type=jnp.float32)
        # jnp.roll(y, -k, axis=0) done as an XLU sublane rotate (free slot)
        # instead of a non-8-aligned sublane slice that forces relayout copies.
        acc = acc + pltpu.roll(y, BtL - k, axis=0)

    acc = jnp.maximum(acc + bconv_ref[...], 0.0)           # bias + ReLU, f32 VPU
    # Zero invalid / wrapped time positions per channel group.  Exact because
    # it happens after ReLU (valid activations are >= 0); then max-over-time.
    acc = acc.reshape(Bt, L, Cop) * mask_ref[...][None]
    pooled = jnp.max(acc, axis=1)                          # (Bt, Cop)

    # Final Linear.  f32 matmul keeps reference numerics; pad rows of fcw are
    # zero so the zero pad channels of `pooled` contribute nothing.
    out_ref[...] = (
        jnp.dot(pooled, fcw_ref[...], preferred_element_type=jnp.float32)
        + fcb_ref[...])
    # TODO(synk): at production sizes, pack the Kmax taps into one
    # (BtL, Kmax*D)-deep im2col matmul to fill MXU contraction depth, and tile
    # the time axis (second grid dim, running max in scratch) to bound VMEM
    # on v7x for long sequences.


def cnn_text_forward(tokens, packed, *, batch_tile=256):
    """tokens: (B, L) int32 token ids -> logits (B, class_num) f32."""
    emb_tbl = packed["embed"]         # (V, D)          bf16
    wconv = packed["wconv"]           # (Kmax, D, Cop)  bf16
    bconv = packed["bconv"]           # (1, Cop)        f32
    fcw = packed["fcw"]               # (Cop, Cp)       f32
    fcb = packed["fcb"]               # (1, Cp)         f32
    kvec = packed["ksize_per_chan"]   # (Cop,)          int32 (0 for pad lanes)
    class_num = packed["class_num"]

    B, L = tokens.shape
    D = emb_tbl.shape[1]
    Kmax, _, Cop = wconv.shape
    Cp = fcb.shape[-1]

    # Embedding lookup: plain-JAX gather.
    # TODO(synk): at production B*L*D, scalar-prefetch `tokens` and gather rows
    # inside the kernel to avoid the HBM round trip of the (B, L, D) emb.
    emb = jnp.take(emb_tbl, tokens, axis=0)                # (B, L, D) bf16

    # Per-channel time-validity mask: position t is valid for a channel with
    # kernel size K iff t <= L - K.  Pad lanes (kvec == 0) are masked to 0.
    t_idx = jnp.arange(L, dtype=jnp.int32)[:, None]
    mask = ((t_idx <= (L - kvec)[None, :]) & (kvec[None, :] > 0)
            ).astype(jnp.float32)                          # (L, Cop)

    # --- Batch tiling -------------------------------------------------------
    # Large tiles amortise the ~0.35us per-grid-step overhead; keep >= 2 grid
    # steps when possible so dimension_semantics=("parallel",) can shard over
    # both v7x TensorCores; clamp Bt so the per-step footprint (emb double
    # buffer + two f32 (Bt*L, Cop) intermediates) stays well inside v7x VMEM.
    B_pad8 = _round_up(B, 8)
    Bt = min(_round_up(max(batch_tile, 8), 8), B_pad8)
    if Bt >= B_pad8 and B_pad8 >= 16:
        Bt = _round_up(B_pad8 // 2, 8)                     # >= 2 grid steps
    bytes_per_row = L * (2 * 2 * D + 2 * 4 * Cop)
    bt_cap = max(8, ((20 << 20) // bytes_per_row) // 8 * 8)
    Bt = min(Bt, bt_cap)
    B_pad = _round_up(B, Bt)
    if B_pad != B:
        emb = jnp.pad(emb, ((0, B_pad - B), (0, 0), (0, 0)))

    kernel = functools.partial(_cnn_text_kernel, Kmax=Kmax)
    logits_padded = pl.pallas_call(
        kernel,
        out_shape=jax.ShapeDtypeStruct((B_pad, Cp), jnp.float32),
        grid=(B_pad // Bt,),
        in_specs=[
            pl.BlockSpec((Bt, L, D), lambda i: (i, 0, 0)),      # batch-tiled emb
            pl.BlockSpec((Kmax, D, Cop), lambda i: (0, 0, 0)),  # grid-invariant
            pl.BlockSpec((1, Cop), lambda i: (0, 0)),
            pl.BlockSpec((L, Cop), lambda i: (0, 0)),
            pl.BlockSpec((Cop, Cp), lambda i: (0, 0)),
            pl.BlockSpec((1, Cp), lambda i: (0, 0)),
        ],
        out_specs=pl.BlockSpec((Bt, Cp), lambda i: (i, 0)),
        compiler_params=pltpu.CompilerParams(
            dimension_semantics=("parallel",),
            # Raises v5e's 16 MiB scoped default; within v6e/v7x defaults.
            vmem_limit_bytes=32 * 1024 * 1024),
    )(emb, wconv, bconv, mask, fcw, fcb)

    # Drop batch padding and the zero-padded logit lanes.
    return logits_padded[:B, :class_num]


# -----------------------------------------------------------------------------
# Parameter construction (PyTorch-equivalent "logical" params + packed/padded
# kernel params) and a pure-JAX reference for correctness checking.
# -----------------------------------------------------------------------------
def init_params(key, *, embed_num, embed_dim, class_num, kernel_num,
                kernel_sizes):
    keys = jax.random.split(key, 2 + 2 * len(kernel_sizes) + 2)
    it = iter(keys)

    def bf16_round(x):  # store MXU-bound weights as bf16-representable values
        return x.astype(jnp.bfloat16).astype(jnp.float32)

    params = {}
    params["embed"] = bf16_round(
        jax.random.normal(next(it), (embed_num, embed_dim), jnp.float32) * 0.1)

    convs = []
    for K in kernel_sizes:
        # PyTorch Conv2d weight is (Co, 1, K, D); store as (K, D, Co).
        w_pt = jax.random.normal(
            next(it), (kernel_num, 1, K, embed_dim), jnp.float32) * 0.1
        w = bf16_round(jnp.transpose(w_pt[:, 0, :, :], (1, 2, 0)))
        b = jax.random.normal(next(it), (kernel_num,), jnp.float32) * 0.01
        convs.append((w, b))
    params["convs"] = convs

    feat = len(kernel_sizes) * kernel_num
    # PyTorch Linear weight is (class_num, feat); store transposed (feat, C).
    fc_w_pt = jax.random.normal(next(it), (class_num, feat), jnp.float32) * 0.1
    params["fc_w"] = fc_w_pt.T
    params["fc_b"] = jax.random.normal(
        next(it), (class_num,), jnp.float32) * 0.01
    params["kernel_sizes"] = list(kernel_sizes)
    return params


def pack_params(params, *, lane_pad=128):
    """Pack ALL conv branches into one lane_pad-wide channel block."""
    Ks = params["kernel_sizes"]
    nK, Kmax = len(Ks), max(Ks)
    D = params["embed"].shape[1]
    Co = params["convs"][0][1].shape[0]
    C = params["fc_b"].shape[0]
    Cop = _round_up(nK * Co, lane_pad)   # one merged 128-lane channel group
    Cp = _round_up(C, lane_pad)

    wconv = jnp.zeros((Kmax, D, Cop), jnp.float32)
    bconv = jnp.zeros((1, Cop), jnp.float32)
    kvec = np.zeros((Cop,), np.int32)
    for i, (K, (w, b)) in enumerate(zip(Ks, params["convs"])):
        lo = i * Co
        wconv = wconv.at[:K, :, lo:lo + Co].set(w)   # taps >= K stay zero
        bconv = bconv.at[0, lo:lo + Co].set(b)
        kvec[lo:lo + Co] = K
    fcw = jnp.zeros((Cop, Cp), jnp.float32).at[:nK * Co, :C].set(params["fc_w"])
    fcb = jnp.zeros((1, Cp), jnp.float32).at[0, :C].set(params["fc_b"])

    return {
        "embed": params["embed"].astype(jnp.bfloat16),
        "wconv": wconv.astype(jnp.bfloat16),
        "bconv": bconv,
        "fcw": fcw,
        "fcb": fcb,
        "ksize_per_chan": jnp.asarray(kvec),
        "class_num": C,
    }


def cnn_text_reference(tokens, params):
    """Plain-JAX reference identical to the PyTorch forward (eval mode)."""
    emb = jnp.take(params["embed"], tokens, axis=0)   # (B, L, D) f32
    B, L, _ = emb.shape
    pooled = []
    for K, (w, b) in zip(params["kernel_sizes"], params["convs"]):
        T = L - K + 1
        acc = jnp.zeros((B, T, w.shape[-1]), jnp.float32)
        for k in range(K):
            acc = acc + jnp.einsum("btd,dc->btc", emb[:, k:k + T, :], w[k],
                                   preferred_element_type=jnp.float32)
        acc = jax.nn.relu(acc + b[None, None, :])
        pooled.append(jnp.max(acc, axis=1))
    feats = jnp.concatenate(pooled, axis=1)
    return feats @ params["fc_w"] + params["fc_b"][None, :]


if __name__ == "__main__":
    # Small, module-consistent config.
    embed_num, embed_dim = 50, 32
    class_num, kernel_num = 5, 8
    kernel_sizes = [3, 4, 5]
    B, L = 16, 16   # tile sizing picks Bt=8 -> two "parallel" grid steps

    key = jax.random.PRNGKey(0)
    k_tok, k_par = jax.random.split(key)
    tokens = jax.random.randint(k_tok, (B, L), 0, embed_num, dtype=jnp.int32)

    params = init_params(
        k_par, embed_num=embed_num, embed_dim=embed_dim,
        class_num=class_num, kernel_num=kernel_num,
        kernel_sizes=kernel_sizes)
    packed = pack_params(params)

    logits = cnn_text_forward(tokens, packed)
    logits = jax.block_until_ready(logits)

    assert logits.shape == (B, class_num)
    assert logits.dtype == jnp.float32

    ref = jax.block_until_ready(cnn_text_reference(tokens, params))
    np.testing.assert_allclose(np.asarray(logits), np.asarray(ref),
                               rtol=1e-3, atol=1e-3)
    print("KERNEL_OK")
</pallas_src>

<mosaic_0001>
module attributes {stable_mosaic.version = 11 : i64} {
  func.func @_cnn_text_kernel(%arg0: i32, %arg1: memref<8x16x32xbf16, #tpu.memory_space<vmem>>, %arg2: memref<5x32x128xbf16, #tpu.memory_space<vmem>>, %arg3: memref<1x128xf32, #tpu.memory_space<vmem>>, %arg4: memref<16x128xf32, #tpu.memory_space<vmem>>, %arg5: memref<128x128xf32, #tpu.memory_space<vmem>>, %arg6: memref<1x128xf32, #tpu.memory_space<vmem>>, %arg7: memref<8x128xf32, #tpu.memory_space<vmem>>) attributes {dimension_semantics = [#tpu.dimension_semantics<parallel>], iteration_bounds = array<i64: 2>, scalar_prefetch = 0 : i64, scratch_operands = 0 : i64, tpu.core_type = #tpu.core_type<tc>, window_params = [{transform_indices = @transform_0, window_bounds = array<i64: 8, 16, 32>}, {pipeline_mode = #tpu.pipeline_mode<synchronous>, transform_indices = @transform_1, window_bounds = array<i64: 5, 32, 128>}, {pipeline_mode = #tpu.pipeline_mode<synchronous>, transform_indices = @transform_2, window_bounds = array<i64: 1, 128>}, {pipeline_mode = #tpu.pipeline_mode<synchronous>, transform_indices = @transform_3, window_bounds = array<i64: 16, 128>}, {pipeline_mode = #tpu.pipeline_mode<synchronous>, transform_indices = @transform_4, window_bounds = array<i64: 128, 128>}, {pipeline_mode = #tpu.pipeline_mode<synchronous>, transform_indices = @transform_5, window_bounds = array<i64: 1, 128>}, {transform_indices = @transform_6, window_bounds = array<i64: 8, 128>}]} {
    %c0 = arith.constant 0 : index
    %c0_0 = arith.constant 0 : index
    %c0_1 = arith.constant 0 : index
    %0 = vector.load %arg1[%c0, %c0_0, %c0_1] : memref<8x16x32xbf16, #tpu.memory_space<vmem>>, vector<8x16x32xbf16>
    %1 = vector.shape_cast %0 : vector<8x16x32xbf16> to vector<128x32xbf16>
    %c0_2 = arith.constant 0 : index
    %c0_3 = arith.constant 0 : index
    %c0_4 = arith.constant 0 : index
    %2 = vector.load %arg2[%c0_2, %c0_3, %c0_4] : memref<5x32x128xbf16, #tpu.memory_space<vmem>>, vector<1x32x128xbf16>
    %3 = vector.shape_cast %2 : vector<1x32x128xbf16> to vector<32x128xbf16>
    %cst = arith.constant dense<0.000000e+00> : vector<128x128xf32>
    %4 = tpu.matmul %1, %3, %cst {dimension_numbers = #tpu.dot_dimension_numbers<[1], [0], [0], [1], [0, 0, 1, 1], [], []>} : vector<128x32xbf16>, vector<32x128xbf16>, vector<128x128xf32> -> vector<128x128xf32>
    %c1 = arith.constant 1 : index
    %c0_5 = arith.constant 0 : index
    %c0_6 = arith.constant 0 : index
    %5 = vector.load %arg2[%c1, %c0_5, %c0_6] : memref<5x32x128xbf16, #tpu.memory_space<vmem>>, vector<1x32x128xbf16>
    %6 = vector.shape_cast %5 : vector<1x32x128xbf16> to vector<32x128xbf16>
    %cst_7 = arith.constant dense<0.000000e+00> : vector<128x128xf32>
    %7 = tpu.matmul %1, %6, %cst_7 {dimension_numbers = #tpu.dot_dimension_numbers<[1], [0], [0], [1], [0, 0, 1, 1], [], []>} : vector<128x32xbf16>, vector<32x128xbf16>, vector<128x128xf32> -> vector<128x128xf32>
    %c127_i32 = arith.constant 127 : i32
    %8 = tpu.dynamic_rotate %7 by %c127_i32 dim 0 : vector<128x128xf32>, i32 -> vector<128x128xf32>
    %9 = arith.addf %4, %8 : vector<128x128xf32>
    %c2 = arith.constant 2 : index
    %c0_8 = arith.constant 0 : index
    %c0_9 = arith.constant 0 : index
    %10 = vector.load %arg2[%c2, %c0_8, %c0_9] : memref<5x32x128xbf16, #tpu.memory_space<vmem>>, vector<1x32x128xbf16>
    %11 = vector.shape_cast %10 : vector<1x32x128xbf16> to vector<32x128xbf16>
    %cst_10 = arith.constant dense<0.000000e+00> : vector<128x128xf32>
    %12 = tpu.matmul %1, %11, %cst_10 {dimension_numbers = #tpu.dot_dimension_numbers<[1], [0], [0], [1], [0, 0, 1, 1], [], []>} : vector<128x32xbf16>, vector<32x128xbf16>, vector<128x128xf32> -> vector<128x128xf32>
    %c126_i32 = arith.constant 126 : i32
    %13 = tpu.dynamic_rotate %12 by %c126_i32 dim 0 : vector<128x128xf32>, i32 -> vector<128x128xf32>
    %14 = arith.addf %9, %13 : vector<128x128xf32>
    %c3 = arith.constant 3 : index
    %c0_11 = arith.constant 0 : index
    %c0_12 = arith.constant 0 : index
    %15 = vector.load %arg2[%c3, %c0_11, %c0_12] : memref<5x32x128xbf16, #tpu.memory_space<vmem>>, vector<1x32x128xbf16>
    %16 = vector.shape_cast %15 : vector<1x32x128xbf16> to vector<32x128xbf16>
    %cst_13 = arith.constant dense<0.000000e+00> : vector<128x128xf32>
    %17 = tpu.matmul %1, %16, %cst_13 {dimension_numbers = #tpu.dot_dimension_numbers<[1], [0], [0], [1], [0, 0, 1, 1], [], []>} : vector<128x32xbf16>, vector<32x128xbf16>, vector<128x128xf32> -> vector<128x128xf32>
    %c125_i32 = arith.constant 125 : i32
    %18 = tpu.dynamic_rotate %17 by %c125_i32 dim 0 : vector<128x128xf32>, i32 -> vector<128x128xf32>
    %19 = arith.addf %14, %18 : vector<128x128xf32>
    %c4 = arith.constant 4 : index
    %c0_14 = arith.constant 0 : index
    %c0_15 = arith.constant 0 : index
    %20 = vector.load %arg2[%c4, %c0_14, %c0_15] : memref<5x32x128xbf16, #tpu.memory_space<vmem>>, vector<1x32x128xbf16>
    %21 = vector.shape_cast %20 : vector<1x32x128xbf16> to vector<32x128xbf16>
    %cst_16 = arith.constant dense<0.000000e+00> : vector<128x128xf32>
    %22 = tpu.matmul %1, %21, %cst_16 {dimension_numbers = #tpu.dot_dimension_numbers<[1], [0], [0], [1], [0, 0, 1, 1], [], []>} : vector<128x32xbf16>, vector<32x128xbf16>, vector<128x128xf32> -> vector<128x128xf32>
    %c124_i32 = arith.constant 124 : i32
    %23 = tpu.dynamic_rotate %22 by %c124_i32 dim 0 : vector<128x128xf32>, i32 -> vector<128x128xf32>
    %24 = arith.addf %19, %23 : vector<128x128xf32>
    %c0_17 = arith.constant 0 : index
    %c0_18 = arith.constant 0 : index
    %25 = vector.load %arg3[%c0_17, %c0_18] : memref<1x128xf32, #tpu.memory_space<vmem>>, vector<1x128xf32>
    %26 = vector.broadcast %25 : vector<1x128xf32> to vector<128x128xf32>
    %27 = arith.addf %24, %26 : vector<128x128xf32>
    %cst_19 = arith.constant 0.000000e+00 : f32
    %28 = vector.broadcast %cst_19 : f32 to vector<128x128xf32>
    %29 = arith.maximumf %27, %28 : vector<128x128xf32>
    %30 = vector.shape_cast %29 : vector<128x128xf32> to vector<8x16x128xf32>
    %c0_20 = arith.constant 0 : index
    %c0_21 = arith.constant 0 : index
    %31 = vector.load %arg4[%c0_20, %c0_21] : memref<16x128xf32, #tpu.memory_space<vmem>>, vector<16x128xf32>
    %32 = vector.shape_cast %31 : vector<16x128xf32> to vector<1x16x128xf32>
    %33 = vector.broadcast %32 : vector<1x16x128xf32> to vector<8x16x128xf32>
    %34 = arith.mulf %30, %33 : vector<8x16x128xf32>
    %cst_22 = arith.constant dense<0xFF800000> : vector<8x128xf32>
    %35 = vector.multi_reduction <maximumf>, %34, %cst_22 [1] : vector<8x16x128xf32> to vector<8x128xf32>
    %c0_23 = arith.constant 0 : index
    %c0_24 = arith.constant 0 : index
    %36 = vector.load %arg5[%c0_23, %c0_24] : memref<128x128xf32, #tpu.memory_space<vmem>>, vector<128x128xf32>
    %cst_25 = arith.constant dense<0.000000e+00> : vector<8x128xf32>
    %37 = tpu.matmul %35, %36, %cst_25 {dimension_numbers = #tpu.dot_dimension_numbers<[1], [0], [0], [1], [0, 0, 1, 1], [], []>} : vector<8x128xf32>, vector<128x128xf32>, vector<8x128xf32> -> vector<8x128xf32>
    %c0_26 = arith.constant 0 : index
    %c0_27 = arith.constant 0 : index
    %38 = vector.load %arg6[%c0_26, %c0_27] : memref<1x128xf32, #tpu.memory_space<vmem>>, vector<1x128xf32>
    %39 = vector.broadcast %38 : vector<1x128xf32> to vector<8x128xf32>
    %40 = arith.addf %37, %39 : vector<8x128xf32>
    %c0_28 = arith.constant 0 : index
    %c0_29 = arith.constant 0 : index
    %41 = vector.load %arg7[%c0_28, %c0_29] : memref<8x128xf32, #tpu.memory_space<vmem>>, vector<8x128xf32>
    tpu.vector_store %arg7[%c0_28, %c0_29], %40 {strides = array<i32>} : memref<8x128xf32, #tpu.memory_space<vmem>>, vector<8x128xf32>,
    return
  }
  func.func @transform_0(%arg0: i32) -> (i32, i32, i32) {
    %c0_i32 = arith.constant 0 : i32
    %c0_i32_0 = arith.constant 0 : i32
    %c0_i32_1 = arith.constant 0 : i32
    return %arg0, %c0_i32, %c0_i32_0 : i32, i32, i32
  }
  func.func @transform_1(%arg0: i32) -> (i32, i32, i32) {
    %c0_i32 = arith.constant 0 : i32
    %c0_i32_0 = arith.constant 0 : i32
    %c0_i32_1 = arith.constant 0 : i32
    %c0_i32_2 = arith.constant 0 : i32
    return %c0_i32, %c0_i32_0, %c0_i32_1 : i32, i32, i32
  }
  func.func @transform_2(%arg0: i32) -> (i32, i32) {
    %c0_i32 = arith.constant 0 : i32
    %c0_i32_0 = arith.constant 0 : i32
    %c0_i32_1 = arith.constant 0 : i32
    return %c0_i32, %c0_i32_0 : i32, i32
  }
  func.func @transform_3(%arg0: i32) -> (i32, i32) {
    %c0_i32 = arith.constant 0 : i32
    %c0_i32_0 = arith.constant 0 : i32
    %c0_i32_1 = arith.constant 0 : i32
    return %c0_i32, %c0_i32_0 : i32, i32
  }
  func.func @transform_4(%arg0: i32) -> (i32, i32) {
    %c0_i32 = arith.constant 0 : i32
    %c0_i32_0 = arith.constant 0 : i32
    %c0_i32_1 = arith.constant 0 : i32
    return %c0_i32, %c0_i32_0 : i32, i32
  }
  func.func @transform_5(%arg0: i32) -> (i32, i32) {
    %c0_i32 = arith.constant 0 : i32
    %c0_i32_0 = arith.constant 0 : i32
    %c0_i32_1 = arith.constant 0 : i32
    return %c0_i32, %c0_i32_0 : i32, i32
  }
  func.func @transform_6(%arg0: i32) -> (i32, i32) {
    %c0_i32 = arith.constant 0 : i32
    %c0_i32_0 = arith.constant 0 : i32
    return %arg0, %c0_i32 : i32, i32
  }
}

</mosaic_0001>

<llo_original>
// kernel: tpu_custom_call.1
$region0: #{tpu_custom_call.1}
  #allocation0 [shape = 'u32[]', space=smem, size = 0x4, offset = 0x4, fixed_abs, tag = 'smem constant byte address 0x4 - core index']
  #allocation1 [shape = 'u32[144,128]{1,0:T(1,128)}', space=vmem, size = 0x12000, scoped, tag = 'internal scratch']
  %s0 = inlined_call_operand.hbm [shape: bf16[16,16,32], index: 0, kind: input, shape index: {}]
  %s1 = inlined_call_operand.hbm [shape: bf16[5,32,128], index: 1, kind: input, shape index: {}]
  %s2 = inlined_call_operand.vmem [shape: f32[1,128], index: 2, kind: input, shape index: {}]
  %s3 = inlined_call_operand.hbm [shape: f32[16,128], index: 3, kind: input, shape index: {}]
  %s4 = inlined_call_operand.hbm [shape: f32[128,128], index: 4, kind: input, shape index: {}]
  %s5 = inlined_call_operand.vmem [shape: f32[1,128], index: 5, kind: input, shape index: {}]
  %s6 = inlined_call_operand.hbm [shape: f32[16,128], index: 6, kind: output, shape index: {}]
  %s7 = sld [smem:[#allocation0]]
  $region73: #{tpu_custom_call.1} parent=0
    _
  %s9 = ssub.s32 1, %s7
  %s10 = scalar_select 0, %s9, %s7
  $region1: #{tpu_custom_call.1} parent=0
    #allocation2 [shape = 'u8[65536]{0}', space=vmem, size = 0x10000, scoped, tag = 'input window, operand 0']
    #allocation3 [shape = 's32[2]{0}', space=sflag, size = 0x8, scoped, tag = 'scoped memory for tpu_custom_call.1']
    #allocation4 [shape = 's32[2]{0}', space=sflag, size = 0x8, scoped, tag = 'scoped memory for tpu_custom_call.1']
    #allocation5 [shape = 'u8[40960]{0}', space=vmem, size = 0xa000, scoped, tag = 'input window, operand 1, single buffered']
    #allocation6 [shape = 's32[1]{0}', space=sflag, size = 0x4, scoped, tag = 'scoped memory for tpu_custom_call.1']
    #allocation7 [shape = 'u8[8192]{0}', space=vmem, size = 0x2000, scoped, tag = 'input window, operand 3, single buffered']
    #allocation8 [shape = 'u8[65536]{0}', space=vmem, size = 0x10000, scoped, tag = 'input window, operand 4, single buffered']
    #allocation9 [shape = 's32[1]{0}', space=sflag, size = 0x4, scoped, tag = 'scoped memory for tpu_custom_call.1']
    #allocation10 [shape = 'u8[8192]{0}', space=vmem, size = 0x2000, scoped, tag = 'output window, operand 0']
    %11 = vsyncpa [#allocation3], 0
    %s12 = scalar_lea.sflag [#allocation3], 1
    %13 = vsyncpa %s12, 0
    %14 = vsyncpa [#allocation6], 0
    %15 = vsyncpa [#allocation9], 0
    %16 = vsyncpa [#allocation4], 0
    %s17 = scalar_lea.sflag [#allocation4], 1
    %18 = vsyncpa %s17, 0
    loop: start=0, step=1, limit=4
    $region2: #{tpu_custom_call.1} parent=1 // loop_pre_header
      _
    $region3: #{tpu_custom_call.1} parent=1 // loop_header
      %s20 = sphi 0, %s24
      %p21 = scmp.ge.s32.totalorder %s20, 4
      %s30 = sphi 0, %s32
      %s33 = sphi 0, %s30
      %s34 = sphi 0, %s33
      %s50 = sphi 0, %s34
      %s54 = sphi 0, %s54
      %s56 = sphi 0, %s54
      %s57 = sphi 0, %s56
      %s71 = sphi 0, %s57
      %s75 = sphi 0, %s75
      %s77 = sphi 0, %s75
      %s78 = sphi 0, %s77
      %s92 = sphi 0, %s78
      %s96 = sphi 0, %s96
      %s98 = sphi 0, %s96
      %s99 = sphi 0, %s98
      %s113 = sphi 0, %s99
      %s117 = sphi 0, %s117
      %s119 = sphi 0, %s117
      %s120 = sphi 0, %s119
      %s134 = sphi 0, %s120
      %s138 = sphi 0, %s138
      %s140 = sphi 0, %s138
      %s141 = sphi 0, %s140
      %s155 = sphi 0, %s141
      %s161 = sphi 0, %s163
      %s164 = sphi 0, %s161
      %s165 = sphi 0, %s164
      %s181 = sphi 0, %s165
    $region4: #{tpu_custom_call.1} parent=1 // loop_header_branch
      %23 = sbr.rel (%p21) target = $region8
    $region5: #{tpu_custom_call.1} parent=1 // loop_body
      %s25 = ssub.s32 %s20, 1
      %s26 = ssub.s32 %s20, 2
      %s27 = sadd.s32 %s20, 1
      %s28 = ssub.s32 %s20, %s27
      %p29 = scmp.eq.s32.totalorder %s28, 0
      %s31 = sadd.s32 %s30, 1
      %s32 = scalar_select %p29, %s30, %s31
      %p35 = pneg %p29
      %p36 = scmp.eq.s32.totalorder %s20, 1
      %p37 = por %p35, %p36
      %p38 = scmp.ne.s32.totalorder %s30, %s33
      %p39 = scmp.eq.s32.totalorder %s20, 0
      %p40 = por %p38, %p39
      %p41 = scmp.ne.s32.totalorder %s30, %s33
      %p42 = scmp.eq.s32.totalorder %s25, 1
      %p43 = por %p41, %p42
      %p44 = scmp.ne.s32.totalorder %s33, %s34
      %p45 = scmp.eq.s32.totalorder %s25, 0
      %p46 = por %p44, %p45
      %p47 = scmp.ne.s32.totalorder %s33, %s34
      %p48 = scmp.eq.s32.totalorder %s26, 1
      %p49 = por %p47, %p48
      %p51 = scmp.ne.s32.totalorder %s34, %s50
      %p52 = scmp.eq.s32.totalorder %s26, 0
      %p53 = por %p51, %p52
      %s55 = sadd.s32 %s54, 1
      %p58 = scmp.eq.s32.totalorder %s20, 1
      %p59 = scmp.ne.s32.totalorder %s54, %s56
      %p60 = scmp.eq.s32.totalorder %s20, 0
      %p61 = por %p59, %p60
      %p62 = scmp.ne.s32.totalorder %s54, %s56
      %p63 = scmp.eq.s32.totalorder %s25, 1
      %p64 = por %p62, %p63
      %p65 = scmp.ne.s32.totalorder %s56, %s57
      %p66 = scmp.eq.s32.totalorder %s25, 0
      %p67 = por %p65, %p66
      %p68 = scmp.ne.s32.totalorder %s56, %s57
      %p69 = scmp.eq.s32.totalorder %s26, 1
      %p70 = por %p68, %p69
      %p72 = scmp.ne.s32.totalorder %s57, %s71
      %p73 = scmp.eq.s32.totalorder %s26, 0
      %p74 = por %p72, %p73
      %s76 = sadd.s32 %s75, 1
      %p79 = scmp.eq.s32.totalorder %s20, 1
      %p80 = scmp.ne.s32.totalorder %s75, %s77
      %p81 = scmp.eq.s32.totalorder %s20, 0
      %p82 = por %p80, %p81
      %p83 = scmp.ne.s32.totalorder %s75, %s77
      %p84 = scmp.eq.s32.totalorder %s25, 1
      %p85 = por %p83, %p84
      %p86 = scmp.ne.s32.totalorder %s77, %s78
      %p87 = scmp.eq.s32.totalorder %s25, 0
      %p88 = por %p86, %p87
      %p89 = scmp.ne.s32.totalorder %s77, %s78
      %p90 = scmp.eq.s32.totalorder %s26, 1
      %p91 = por %p89, %p90
      %p93 = scmp.ne.s32.totalorder %s78, %s92
      %p94 = scmp.eq.s32.totalorder %s26, 0
      %p95 = por %p93, %p94
      %s97 = sadd.s32 %s96, 1
      %p100 = scmp.eq.s32.totalorder %s20, 1
      %p101 = scmp.ne.s32.totalorder %s96, %s98
      %p102 = scmp.eq.s32.totalorder %s20, 0
      %p103 = por %p101, %p102
      %p104 = scmp.ne.s32.totalorder %s96, %s98
      %p105 = scmp.eq.s32.totalorder %s25, 1
      %p106 = por %p104, %p105
      %p107 = scmp.ne.s32.totalorder %s98, %s99
      %p108 = scmp.eq.s32.totalorder %s25, 0
      %p109 = por %p107, %p108
      %p110 = scmp.ne.s32.totalorder %s98, %s99
      %p111 = scmp.eq.s32.totalorder %s26, 1
      %p112 = por %p110, %p111
      %p114 = scmp.ne.s32.totalorder %s99, %s113
      %p115 = scmp.eq.s32.totalorder %s26, 0
      %p116 = por %p114, %p115
      %s118 = sadd.s32 %s117, 1
      %p121 = scmp.eq.s32.totalorder %s20, 1
      %p122 = scmp.ne.s32.totalorder %s117, %s119
      %p123 = scmp.eq.s32.totalorder %s20, 0
      %p124 = por %p122, %p123
      %p125 = scmp.ne.s32.totalorder %s117, %s119
      %p126 = scmp.eq.s32.totalorder %s25, 1
      %p127 = por %p125, %p126
      %p128 = scmp.ne.s32.totalorder %s119, %s120
      %p129 = scmp.eq.s32.totalorder %s25, 0
      %p130 = por %p128, %p129
      %p131 = scmp.ne.s32.totalorder %s119, %s120
      %p132 = scmp.eq.s32.totalorder %s26, 1
      %p133 = por %p131, %p132
      %p135 = scmp.ne.s32.totalorder %s120, %s134
      %p136 = scmp.eq.s32.totalorder %s26, 0
      %p137 = por %p135, %p136
      %s139 = sadd.s32 %s138, 1
      %p142 = scmp.eq.s32.totalorder %s20, 1
      %p143 = scmp.ne.s32.totalorder %s138, %s140
      %p144 = scmp.eq.s32.totalorder %s20, 0
      %p145 = por %p143, %p144
      %p146 = scmp.ne.s32.totalorder %s138, %s140
      %p147 = scmp.eq.s32.totalorder %s25, 1
      %p148 = por %p146, %p147
      %p149 = scmp.ne.s32.totalorder %s140, %s141
      %p150 = scmp.eq.s32.totalorder %s25, 0
      %p151 = por %p149, %p150
      %p152 = scmp.ne.s32.totalorder %s140, %s141
      %p153 = scmp.eq.s32.totalorder %s26, 1
      %p154 = por %p152, %p153
      %p156 = scmp.ne.s32.totalorder %s141, %s155
      %p157 = scmp.eq.s32.totalorder %s26, 0
      %p158 = por %p156, %p157
      %s159 = ssub.s32 %s20, %s27
      %p160 = scmp.eq.s32.totalorder %s159, 0
      %s162 = sadd.s32 %s161, 1
      %s163 = scalar_select %p160, %s161, %s162
      %p166 = pneg %p160
      %p167 = scmp.eq.s32.totalorder %s20, 1
      %p168 = por %p166, %p167
      %p169 = scmp.ne.s32.totalorder %s161, %s164
      %p170 = scmp.eq.s32.totalorder %s20, 0
      %p171 = por %p169, %p170
      %p172 = scmp.ne.s32.totalorder %s161, %s164
      %p173 = scmp.eq.s32.totalorder %s25, 1
      %p174 = por %p172, %p173
      %p175 = scmp.ne.s32.totalorder %s164, %s165
      %p176 = scmp.eq.s32.totalorder %s25, 0
      %p177 = por %p175, %p176
      %p178 = scmp.ne.s32.totalorder %s164, %s165
      %p179 = scmp.eq.s32.totalorder %s26, 1
      %p180 = por %p178, %p179
      %p182 = scmp.ne.s32.totalorder %s165, %s181
      %p183 = scmp.eq.s32.totalorder %s26, 0
      %p184 = por %p182, %p183
      %p185 = scmp.le.s32.totalorder 1, %s20
      %p186 = scmp.lt.s32.totalorder %s20, 3
      %p187 = pnand %p185, %p186
      %p188 = pneg %p187
      // Predicated region
      $region9: #{tpu_custom_call.1} parent=5 // pred_check
        _
      $region10: #{tpu_custom_call.1} parent=5 // pred_check_branch
        %190 = sbr.rel (%p187) target = $region12
      $region11: #{tpu_custom_call.1} parent=5 // pred_region
        %s191 = ssub.s32 %s20, 1
        // Predicated region
        $region13: #{tpu_custom_call.1} parent=11 // pred_check
          %p192 = pneg %p67
        $region14: #{tpu_custom_call.1} parent=11 // pred_check_branch
          %194 = sbr.rel (%p192) target = $region16
        $region15: #{tpu_custom_call.1} parent=11 // pred_region
          %s196 = ssub.s32 1280, 1280
          %197 = vsyncadd [#allocation6], %s196
          %s198 = sshll.u32 [#allocation5], 4
          %s199 = int_to_ptr.vmem [resolvable:$true] %s198
          %204 = dma.hbm_to_vmem [thread:$0]  %s1, 1280, %s199, [#allocation6], 64, 64, 4
        $region16: #{tpu_custom_call.1} parent=11 // pred_fallthru
          _
        // Predicated region
        $region17: #{tpu_custom_call.1} parent=11 // pred_check
          %p205 = pneg %p88
        $region18: #{tpu_custom_call.1} parent=11 // pred_check_branch
          %207 = sbr.rel (%p205) target = $region20
        $region19: #{tpu_custom_call.1} parent=11 // pred_region
          _
        $region20: #{tpu_custom_call.1} parent=11 // pred_fallthru
          _
        // Predicated region
        $region21: #{tpu_custom_call.1} parent=11 // pred_check
          %p208 = pneg %p109
        $region22: #{tpu_custom_call.1} parent=11 // pred_check_branch
          %210 = sbr.rel (%p208) target = $region24
        $region23: #{tpu_custom_call.1} parent=11 // pred_region
          %s212 = ssub.s32 256, 256
          %213 = vsyncadd [#allocation6], %s212
          %s214 = sshll.u32 [#allocation7], 4
          %s215 = int_to_ptr.vmem [resolvable:$true] %s214
          %220 = dma.hbm_to_vmem [thread:$0]  %s3, 256, %s215, [#allocation6], 128, 128, 8
        $region24: #{tpu_custom_call.1} parent=11 // pred_fallthru
          _
        // Predicated region
        $region25: #{tpu_custom_call.1} parent=11 // pred_check
          %p221 = pneg %p130
        $region26: #{tpu_custom_call.1} parent=11 // pred_check_branch
          %223 = sbr.rel (%p221) target = $region28
        $region27: #{tpu_custom_call.1} parent=11 // pred_region
          %s225 = ssub.s32 2048, 2048
          %226 = vsyncadd [#allocation9], %s225
          %s227 = sshll.u32 [#allocation8], 4
          %s228 = int_to_ptr.vmem [resolvable:$true] %s227
          %233 = dma.hbm_to_vmem [thread:$0]  %s4, 2048, %s228, [#allocation9], 128, 128, 8
        $region28: #{tpu_custom_call.1} parent=11 // pred_fallthru
          _
        // Predicated region
        $region29: #{tpu_custom_call.1} parent=11 // pred_check
          %p234 = pneg %p151
        $region30: #{tpu_custom_call.1} parent=11 // pred_check_branch
          %236 = sbr.rel (%p234) target = $region32
        $region31: #{tpu_custom_call.1} parent=11 // pred_region
          _
        $region32: #{tpu_custom_call.1} parent=11 // pred_fallthru
          _
      $region12: #{tpu_custom_call.1} parent=5 // pred_fallthru
        _
      %p237 = scmp.lt.s32.totalorder %s20, 2
      // Predicated region
      $region33: #{tpu_custom_call.1} parent=5 // pred_check
        %p238 = pneg %p237
      $region34: #{tpu_custom_call.1} parent=5 // pred_check_branch
        %240 = sbr.rel (%p238) target = $region36
      $region35: #{tpu_custom_call.1} parent=5 // pred_region
        // Predicated region
        $region37: #{tpu_custom_call.1} parent=35 // pred_check
          %p241 = pneg %p40
        $region38: #{tpu_custom_call.1} parent=35 // pred_check_branch
          %243 = sbr.rel (%p241) target = $region40
        $region39: #{tpu_custom_call.1} parent=35 // pred_region
          %s244 = sand.u32 %s30, 1
          %s245 = scalar_lea.sflag [#allocation3], %s244
          %s246 = sand.u32 %s30, 1
          %s247 = smul.addr %s246, 64
          %s248 = scalar_lea.vmem [#allocation2], %s247
          %s249 = smul.u32 8, %s20
          %s251 = ssub.s32 1024, 1024
          %252 = vsyncadd %s245, %s251
          %s253 = smul.addr %s249, 2
          %s254 = smul.addr %s253, 64
          %s255 = scalar_lea.hbm %s0, %s254
          %s256 = sshll.u32 %s248, 4
          %s257 = int_to_ptr.vmem [resolvable:$true] %s256
          %262 = dma.hbm_to_vmem [thread:$0]  %s255, 1024, %s257, %s245, 64, 64, 4
        $region40: #{tpu_custom_call.1} parent=35 // pred_fallthru
          _
      $region36: #{tpu_custom_call.1} parent=5 // pred_fallthru
        _
      %p263 = scmp.le.s32.totalorder 1, %s20
      %p264 = scmp.lt.s32.totalorder %s20, 3
      %p265 = pnand %p263, %p264
      %p266 = pneg %p265
      // Predicated region
      $region41: #{tpu_custom_call.1} parent=5 // pred_check
        _
      $region42: #{tpu_custom_call.1} parent=5 // pred_check_branch
        %268 = sbr.rel (%p265) target = $region44
      $region43: #{tpu_custom_call.1} parent=5 // pred_region
        %s269 = ssub.s32 %s20, 1
        %s270 = sand.u32 %s33, 1
        %s271 = scalar_lea.sflag [#allocation3], %s270
        %s272 = sand.u32 %s33, 1
        %s273 = smul.addr %s272, 64
        %s274 = scalar_lea.vmem [#allocation2], %s273
        // Predicated region
        $region45: #{tpu_custom_call.1} parent=43 // pred_check
          %p275 = pneg %p46
        $region46: #{tpu_custom_call.1} parent=43 // pred_check_branch
          %277 = sbr.rel (%p275) target = $region48
        $region47: #{tpu_custom_call.1} parent=43 // pred_region
          %278 = dma.done %s271, 1024
        $region48: #{tpu_custom_call.1} parent=43 // pred_fallthru
          _
        // Predicated region
        $region49: #{tpu_custom_call.1} parent=43 // pred_check
          %p279 = pneg %p67
        $region50: #{tpu_custom_call.1} parent=43 // pred_check_branch
          %281 = sbr.rel (%p279) target = $region52
        $region51: #{tpu_custom_call.1} parent=43 // pred_region
          %282 = dma.done [#allocation6], 1280
        $region52: #{tpu_custom_call.1} parent=43 // pred_fallthru
          _
        // Predicated region
        $region53: #{tpu_custom_call.1} parent=43 // pred_check
          %p283 = pneg %p109
        $region54: #{tpu_custom_call.1} parent=43 // pred_check_branch
          %285 = sbr.rel (%p283) target = $region56
        $region55: #{tpu_custom_call.1} parent=43 // pred_region
          %286 = dma.done [#allocation6], 256
        $region56: #{tpu_custom_call.1} parent=43 // pred_fallthru
          _
        // Predicated region
        $region57: #{tpu_custom_call.1} parent=43 // pred_check
          %p287 = pneg %p130
        $region58: #{tpu_custom_call.1} parent=43 // pred_check_branch
          %289 = sbr.rel (%p287) target = $region60
        $region59: #{tpu_custom_call.1} parent=43 // pred_region
          %290 = dma.done [#allocation9], 2048
        $region60: #{tpu_custom_call.1} parent=43 // pred_fallthru
          _
        %s291 = sand.u32 %s33, 1
        %s292 = scalar_lea.sflag [#allocation3], %s291
        %s293 = sand.u32 %s33, 1
        %s294 = smul.addr %s293, 64
        %s295 = scalar_lea.vmem [#allocation2], %s294
        %p296 = pneg %p46
        %p297 = pneg %p43
        %p298 = pneg %p67
        %p299 = pneg %p64
        %p300 = pneg %p88
        %p301 = pneg %p85
        %p302 = pneg %p109
        %p303 = pneg %p106
        %p304 = pneg %p130
        %p305 = pneg %p127
        %p306 = pneg %p151
        %p307 = pneg %p148
        %p308 = pneg %p177
        %p309 = pneg %p174
        %s310 = sand.u32 %s164, 1
        %s311 = scalar_lea.sflag [#allocation4], %s310
        %s312 = sand.u32 %s164, 1
        %s313 = smul.addr %s312, 8
        %s314 = scalar_lea.vmem [#allocation10], %s313
        %s315 = smul.u32 8, %s25
        %v317 = vld [vmem:[%s274] sm:$0xf]
        %v318 = vld [vmem:[%s274 + $0x4] sm:$0xf]
        %v319 = vld [vmem:[%s274 + $0x8] sm:$0xf]
        %v320 = vld [vmem:[%s274 + $0xc] sm:$0xf]
        %v321 = vld [vmem:[%s274 + $0x10] sm:$0xf]
        %v322 = vld [vmem:[%s274 + $0x14] sm:$0xf]
        %v323 = vld [vmem:[%s274 + $0x18] sm:$0xf]
        %v324 = vld [vmem:[%s274 + $0x1c] sm:$0xf]
        %v325 = vld [vmem:[%s274 + $0x20] sm:$0xf]
        %v326 = vld [vmem:[%s274 + $0x24] sm:$0xf]
        %v327 = vld [vmem:[%s274 + $0x28] sm:$0xf]
        %v328 = vld [vmem:[%s274 + $0x2c] sm:$0xf]
        %v329 = vld [vmem:[%s274 + $0x30] sm:$0xf]
        %v330 = vld [vmem:[%s274 + $0x34] sm:$0xf]
        %v331 = vld [vmem:[%s274 + $0x38] sm:$0xf]
        %v332 = vld [vmem:[%s274 + $0x3c] sm:$0xf]
        %v333 = vld [vmem:[#allocation5] sm:$0xf]
        %v334 = vld [vmem:[#allocation5 + $0x4] sm:$0xf]
        %v335 = vld [vmem:[#allocation5 + $0x8] sm:$0xf]
        %v336 = vld [vmem:[#allocation5 + $0xc] sm:$0xf]
        %s337 = scalar_lea.vmem [#allocation5], 16
        %v338 = vld [vmem:[%s337] sm:$0xf]
        %v339 = vld [vmem:[%s337 + $0x4] sm:$0xf]
        %v340 = vld [vmem:[%s337 + $0x8] sm:$0xf]
        %v341 = vld [vmem:[%s337 + $0xc] sm:$0xf]
        %v358 = vunpack.c.l.b16 %v317
        %v359 = vunpack.c.l.b16 %v318
        %v360 = vunpack.c.l.b16 %v319
        %v361 = vunpack.c.l.b16 %v320
        %v362 = vunpack.c.l.b16 %v321
        %v363 = vunpack.c.l.b16 %v322
        %v364 = vunpack.c.l.b16 %v323
        %v365 = vunpack.c.l.b16 %v324
        %v366 = vunpack.c.l.b16 %v325
        %v367 = vunpack.c.l.b16 %v326
        %v368 = vunpack.c.l.b16 %v327
        %v369 = vunpack.c.l.b16 %v328
        %v370 = vunpack.c.l.b16 %v329
        %v371 = vunpack.c.l.b16 %v330
        %v372 = vunpack.c.l.b16 %v331
        %v373 = vunpack.c.l.b16 %v332
        %v374 = vpack.c.b16 %v359, %v358
        %v375 = vpack.c.b16 %v361, %v360
        %v376 = vpack.c.b16 %v363, %v362
        %v377 = vpack.c.b16 %v365, %v364
        %v378 = vpack.c.b16 %v367, %v366
        %v379 = vpack.c.b16 %v369, %v368
        %v380 = vpack.c.b16 %v371, %v370
        %v381 = vpack.c.b16 %v373, %v372
        %v386 = vunpack.c.l.b16 %v338
        %v387 = vunpack.c.l.b16 %v339
        %v388 = vunpack.c.l.b16 %v340
        %v389 = vunpack.c.l.b16 %v341
        %v390 = vpack.c.b16 %v387, %v386
        %v391 = vpack.c.b16 %v389, %v388
        %vm394 = vcmask 261120
        %v396 = vsel %vm394, %v374, 0
        %v399 = vsel %vm394, %v375, 0
        %v402 = vsel %vm394, %v376, 0
        %v405 = vsel %vm394, %v377, 0
        %v408 = vsel %vm394, %v378, 0
        %v411 = vsel %vm394, %v379, 0
        %v414 = vsel %vm394, %v380, 0
        %v417 = vsel %vm394, %v381, 0
        %419 = vmatprep.subr.bf16.mxu0 0
        %420 = vmatpush1.bf16.msra.mxu0 %v390
        %421 = vmatprep.subr.bf16.mxu0 0
        %422 = vmatpush1.bf16.msra.mxu0 %v391
        %423 = vmatprep.subr.bf16.mxu0 0
        %424 = vmatpush1.bf16.msra.mxu0 0
        %425 = vmatprep.subr.bf16.mxu0 0
        %426 = vmatpush1.bf16.msra.mxu0 0
        %427 = vmatprep.subr.bf16.mxu0 0
        %428 = vmatpush1.bf16.msra.mxu0 0
        %429 = vmatprep.subr.bf16.mxu0 0
        %430 = vmatpush1.bf16.msra.mxu0 0
        %431 = vmatprep.subr.bf16.mxu0 0
        %432 = vmatpush1.bf16.msra.mxu0 0
        %433 = vmatprep.subr.bf16.mxu0 0
        %434 = vmatpush1.bf16.msra.mxu0 0
        %435 = vmatprep.subr.bf16.mxu0 0
        %436 = vmatpush1.bf16.msra.mxu0 0
        %437 = vmatprep.subr.bf16.mxu0 0
        %438 = vmatpush1.bf16.msra.mxu0 0
        %439 = vmatprep.subr.bf16.mxu0 0
        %440 = vmatpush1.bf16.msra.mxu0 0
        %441 = vmatprep.subr.bf16.mxu0 0
        %442 = vmatpush1.bf16.msra.mxu0 0
        %443 = vmatprep.subr.bf16.mxu0 0
        %444 = vmatpush1.bf16.msra.mxu0 0
        %445 = vmatprep.subr.bf16.mxu0 0
        %446 = vmatpush1.bf16.msra.mxu0 0
        %447 = vmatprep.subr.bf16.mxu0 0
        %448 = vmatpush1.bf16.msra.mxu0 0
        %449 = vmatprep.subr.bf16.mxu0 0
        %450 = vmatpush1.bf16.msra.mxu0 0
        %451 = vmatprep.mubr.bf16.mxu0 0
        %452 = vmatmul.mubr.bf16.gmra.mrb[0].mxu0 %v396
        %v453 = vpop.f32.mrb[0].mxu0
        %v454 = vadd.f32 0.0, %v453
        %v455 = vpop.f32.mrb[0].mxu0
        %v456 = vpop.f32.mrb[0].mxu0
        %v457 = vadd.f32 0.0, %v456
        %v458 = vpop.f32.mrb[0].mxu0
        %459 = vmatprep.mubr.bf16.mxu0 0
        %460 = vmatmul.mubr.bf16.gmra.mrb[0].mxu0 %v399
        %v461 = vpop.f32.mrb[0].mxu0
        %v462 = vadd.f32 0.0, %v461
        %v463 = vpop.f32.mrb[0].mxu0
        %v464 = vpop.f32.mrb[0].mxu0
        %v465 = vadd.f32 0.0, %v464
        %v466 = vpop.f32.mrb[0].mxu0
        %467 = vmatprep.mubr.bf16.mxu0 0
        %468 = vmatmul.mubr.bf16.gmra.mrb[0].mxu0 %v402
        %v469 = vpop.f32.mrb[0].mxu0
        %v470 = vadd.f32 0.0, %v469
        %v471 = vpop.f32.mrb[0].mxu0
        %v472 = vpop.f32.mrb[0].mxu0
        %v473 = vadd.f32 0.0, %v472
        %v474 = vpop.f32.mrb[0].mxu0
        %475 = vmatprep.mubr.bf16.mxu0 0
        %476 = vmatmul.mubr.bf16.gmra.mrb[0].mxu0 %v405
        %v477 = vpop.f32.mrb[0].mxu0
        %v478 = vadd.f32 0.0, %v477
        %v479 = vpop.f32.mrb[0].mxu0
        %v480 = vpop.f32.mrb[0].mxu0
        %v481 = vadd.f32 0.0, %v480
        %v482 = vpop.f32.mrb[0].mxu0
        %483 = vmatprep.mubr.bf16.mxu0 0
        %484 = vmatmul.mubr.bf16.gmra.mrb[0].mxu0 %v408
        %v485 = vpop.f32.mrb[0].mxu0
        %v486 = vadd.f32 0.0, %v485
        %v487 = vpop.f32.mrb[0].mxu0
        %v488 = vpop.f32.mrb[0].mxu0
        %v489 = vadd.f32 0.0, %v488
        %v490 = vpop.f32.mrb[0].mxu0
        %491 = vmatprep.mubr.bf16.mxu0 0
        %492 = vmatmul.mubr.bf16.gmra.mrb[0].mxu0 %v411
        %v493 = vpop.f32.mrb[0].mxu0
        %v494 = vadd.f32 0.0, %v493
        %v495 = vpop.f32.mrb[0].mxu0
        %v496 = vpop.f32.mrb[0].mxu0
        %v497 = vadd.f32 0.0, %v496
        %v498 = vpop.f32.mrb[0].mxu0
        %499 = vmatprep.mubr.bf16.mxu0 0
        %500 = vmatmul.mubr.bf16.gmra.mrb[0].mxu0 %v414
        %v501 = vpop.f32.mrb[0].mxu0
        %v502 = vadd.f32 0.0, %v501
        %v503 = vpop.f32.mrb[0].mxu0
        %v504 = vpop.f32.mrb[0].mxu0
        %v505 = vadd.f32 0.0, %v504
        %v506 = vpop.f32.mrb[0].mxu0
        %507 = vmatprep.mubr.bf16.mxu0 0
        %508 = vmatmul.mubr.bf16.gmra.mrb[0].mxu0 %v417
        %v509 = vpop.f32.mrb[0].mxu0
        %v510 = vadd.f32 0.0, %v509
        %v511 = vpop.f32.mrb[0].mxu0
        %v512 = vpop.f32.mrb[0].mxu0
        %v513 = vadd.f32 0.0, %v512
        %v514 = vpop.f32.mrb[0].mxu0
        %515 = vdwg.mxu0
        %v516 = vrot.slane %v454, 1
        %v517 = vrot.slane %v457, 1
        %v518 = vrot.slane %v462, 1
        %v519 = vrot.slane %v465, 1
        %v520 = vrot.slane %v470, 1
        %v521 = vrot.slane %v473, 1
        %v522 = vrot.slane %v478, 1
        %v523 = vrot.slane %v481, 1
        %v524 = vrot.slane %v486, 1
        %v525 = vrot.slane %v489, 1
        %v526 = vrot.slane %v494, 1
        %v527 = vrot.slane %v497, 1
        %v528 = vrot.slane %v502, 1
        %v529 = vrot.slane %v505, 1
        %v530 = vrot.slane %v510, 1
        %v531 = vrot.slane %v513, 1
        %v532 = vlaneseq
        %v533 = vshrl.u32 %v532, 7
        %vm534 = vcmp.lt.s32.totalorder %v533, 7
        %v535 = vsel %vm534, %v530, %v531
        %v536 = vsel %vm534, %v529, %v530
        %v537 = vsel %vm534, %v528, %v529
        %v538 = vsel %vm534, %v527, %v528
        %v539 = vsel %vm534, %v526, %v527
        %v540 = vsel %vm534, %v525, %v526
        %v541 = vsel %vm534, %v524, %v525
        %v542 = vsel %vm534, %v523, %v524
        %v543 = vsel %vm534, %v522, %v523
        %v544 = vsel %vm534, %v521, %v522
        %v545 = vsel %vm534, %v520, %v521
        %v546 = vsel %vm534, %v519, %v520
        %v547 = vsel %vm534, %v518, %v519
        %v548 = vsel %vm534, %v517, %v518
        %v549 = vsel %vm534, %v516, %v517
        %v550 = vsel %vm534, %v531, %v516
        %v555 = vunpack.c.l.b16 %v333
        %v556 = vunpack.c.l.b16 %v334
        %v557 = vunpack.c.l.b16 %v335
        %v558 = vunpack.c.l.b16 %v336
        %v559 = vpack.c.b16 %v556, %v555
        %v560 = vpack.c.b16 %v558, %v557
        %563 = vmatprep.subr.bf16.mxu0 0
        %564 = vmatpush1.bf16.msra.mxu0 %v559
        %565 = vmatprep.subr.bf16.mxu0 0
        %566 = vmatpush1.bf16.msra.mxu0 %v560
        %567 = vmatprep.subr.bf16.mxu0 0
        %568 = vmatpush1.bf16.msra.mxu0 0
        %569 = vmatprep.subr.bf16.mxu0 0
        %570 = vmatpush1.bf16.msra.mxu0 0
        %571 = vmatprep.subr.bf16.mxu0 0
        %572 = vmatpush1.bf16.msra.mxu0 0
        %573 = vmatprep.subr.bf16.mxu0 0
        %574 = vmatpush1.bf16.msra.mxu0 0
        %575 = vmatprep.subr.bf16.mxu0 0
        %576 = vmatpush1.bf16.msra.mxu0 0
        %577 = vmatprep.subr.bf16.mxu0 0
        %578 = vmatpush1.bf16.msra.mxu0 0
        %579 = vmatprep.subr.bf16.mxu0 0
        %580 = vmatpush1.bf16.msra.mxu0 0
        %581 = vmatprep.subr.bf16.mxu0 0
        %582 = vmatpush1.bf16.msra.mxu0 0
        %583 = vmatprep.subr.bf16.mxu0 0
        %584 = vmatpush1.bf16.msra.mxu0 0
        %585 = vmatprep.subr.bf16.mxu0 0
        %586 = vmatpush1.bf16.msra.mxu0 0
        %587 = vmatprep.subr.bf16.mxu0 0
        %588 = vmatpush1.bf16.msra.mxu0 0
        %589 = vmatprep.subr.bf16.mxu0 0
        %590 = vmatpush1.bf16.msra.mxu0 0
        %591 = vmatprep.subr.bf16.mxu0 0
        %592 = vmatpush1.bf16.msra.mxu0 0
        %593 = vmatprep.subr.bf16.mxu0 0
        %594 = vmatpush1.bf16.msra.mxu0 0
        %595 = vmatprep.mubr.bf16.mxu0 0
        %596 = vmatmul.mubr.bf16.gmra.mrb[0].mxu0 %v396
        %v597 = vpop.f32.mrb[0].mxu0
        %v598 = vadd.f32 %v549, %v597
        %v599 = vpop.f32.mrb[0].mxu0
        %v600 = vpop.f32.mrb[0].mxu0
        %v601 = vadd.f32 %v548, %v600
        %v602 = vpop.f32.mrb[0].mxu0
        %603 = vmatprep.mubr.bf16.mxu0 0
        %604 = vmatmul.mubr.bf16.gmra.mrb[0].mxu0 %v399
        %v605 = vpop.f32.mrb[0].mxu0
        %v606 = vadd.f32 %v547, %v605
        %v607 = vpop.f32.mrb[0].mxu0
        %v608 = vpop.f32.mrb[0].mxu0
        %v609 = vadd.f32 %v546, %v608
        %v610 = vpop.f32.mrb[0].mxu0
        %611 = vmatprep.mubr.bf16.mxu0 0
        %612 = vmatmul.mubr.bf16.gmra.mrb[0].mxu0 %v402
        %v613 = vpop.f32.mrb[0].mxu0
        %v614 = vadd.f32 %v545, %v613
        %v615 = vpop.f32.mrb[0].mxu0
        %v616 = vpop.f32.mrb[0].mxu0
        %v617 = vadd.f32 %v544, %v616
        %v618 = vpop.f32.mrb[0].mxu0
        %619 = vmatprep.mubr.bf16.mxu0 0
        %620 = vmatmul.mubr.bf16.gmra.mrb[0].mxu0 %v405
        %v621 = vpop.f32.mrb[0].mxu0
        %v622 = vadd.f32 %v543, %v621
        %v623 = vpop.f32.mrb[0].mxu0
        %v624 = vpop.f32.mrb[0].mxu0
        %v625 = vadd.f32 %v542, %v624
        %v626 = vpop.f32.mrb[0].mxu0
        %627 = vmatprep.mubr.bf16.mxu0 0
        %628 = vmatmul.mubr.bf16.gmra.mrb[0].mxu0 %v408
        %v629 = vpop.f32.mrb[0].mxu0
        %v630 = vadd.f32 %v541, %v629
        %v631 = vpop.f32.mrb[0].mxu0
        %v632 = vpop.f32.mrb[0].mxu0
        %v633 = vadd.f32 %v540, %v632
        %v634 = vpop.f32.mrb[0].mxu0
        %635 = vmatprep.mubr.bf16.mxu0 0
        %636 = vmatmul.mubr.bf16.gmra.mrb[0].mxu0 %v411
        %v637 = vpop.f32.mrb[0].mxu0
        %v638 = vadd.f32 %v539, %v637
        %v639 = vpop.f32.mrb[0].mxu0
        %v640 = vpop.f32.mrb[0].mxu0
        %v641 = vadd.f32 %v538, %v640
        %v642 = vpop.f32.mrb[0].mxu0
        %643 = vmatprep.mubr.bf16.mxu0 0
        %644 = vmatmul.mubr.bf16.gmra.mrb[0].mxu0 %v414
        %v645 = vpop.f32.mrb[0].mxu0
        %v646 = vadd.f32 %v537, %v645
        %v647 = vpop.f32.mrb[0].mxu0
        %v648 = vpop.f32.mrb[0].mxu0
        %v649 = vadd.f32 %v536, %v648
        %v650 = vpop.f32.mrb[0].mxu0
        %651 = vmatprep.mubr.bf16.mxu0 0
        %652 = vmatmul.mubr.bf16.gmra.mrb[0].mxu0 %v417
        %v653 = vpop.f32.mrb[0].mxu0
        %v654 = vadd.f32 %v535, %v653
        %v655 = vpop.f32.mrb[0].mxu0
        %v656 = vpop.f32.mrb[0].mxu0
        %v657 = vadd.f32 %v550, %v656
        %v658 = vpop.f32.mrb[0].mxu0
        %659 = vdwg.mxu0
        %s660 = scalar_lea.vmem [#allocation5], 32
        %v661 = vld [vmem:[%s660] sm:$0xf]
        %v662 = vld [vmem:[%s660 + $0x4] sm:$0xf]
        %v663 = vld [vmem:[%s660 + $0x8] sm:$0xf]
        %v664 = vld [vmem:[%s660 + $0xc] sm:$0xf]
        %v669 = vunpack.c.l.b16 %v661
        %v670 = vunpack.c.l.b16 %v662
        %v671 = vunpack.c.l.b16 %v663
        %v672 = vunpack.c.l.b16 %v664
        %v673 = vpack.c.b16 %v670, %v669
        %v674 = vpack.c.b16 %v672, %v671
        %677 = vmatprep.subr.bf16.mxu0 0
        %678 = vmatpush1.bf16.msra.mxu0 %v673
        %679 = vmatprep.subr.bf16.mxu0 0
        %680 = vmatpush1.bf16.msra.mxu0 %v674
        %681 = vmatprep.subr.bf16.mxu0 0
        %682 = vmatpush1.bf16.msra.mxu0 0
        %683 = vmatprep.subr.bf16.mxu0 0
        %684 = vmatpush1.bf16.msra.mxu0 0
        %685 = vmatprep.subr.bf16.mxu0 0
        %686 = vmatpush1.bf16.msra.mxu0 0
        %687 = vmatprep.subr.bf16.mxu0 0
        %688 = vmatpush1.bf16.msra.mxu0 0
        %689 = vmatprep.subr.bf16.mxu0 0
        %690 = vmatpush1.bf16.msra.mxu0 0
        %691 = vmatprep.subr.bf16.mxu0 0
        %692 = vmatpush1.bf16.msra.mxu0 0
        %693 = vmatprep.subr.bf16.mxu0 0
        %694 = vmatpush1.bf16.msra.mxu0 0
        %695 = vmatprep.subr.bf16.mxu0 0
        %696 = vmatpush1.bf16.msra.mxu0 0
        %697 = vmatprep.subr.bf16.mxu0 0
        %698 = vmatpush1.bf16.msra.mxu0 0
        %699 = vmatprep.subr.bf16.mxu0 0
        %700 = vmatpush1.bf16.msra.mxu0 0
        %701 = vmatprep.subr.bf16.mxu0 0
        %702 = vmatpush1.bf16.msra.mxu0 0
        %703 = vmatprep.subr.bf16.mxu0 0
        %704 = vmatpush1.bf16.msra.mxu0 0
        %705 = vmatprep.subr.bf16.mxu0 0
        %706 = vmatpush1.bf16.msra.mxu0 0
        %707 = vmatprep.subr.bf16.mxu0 0
        %708 = vmatpush1.bf16.msra.mxu0 0
        %709 = vmatprep.mubr.bf16.mxu0 0
        %710 = vmatmul.mubr.bf16.gmra.mrb[0].mxu0 %v396
        %v711 = vpop.f32.mrb[0].mxu0
        %v712 = vadd.f32 0.0, %v711
        %v713 = vpop.f32.mrb[0].mxu0
        %v714 = vpop.f32.mrb[0].mxu0
        %v715 = vadd.f32 0.0, %v714
        %v716 = vpop.f32.mrb[0].mxu0
        %717 = vmatprep.mubr.bf16.mxu0 0
        %718 = vmatmul.mubr.bf16.gmra.mrb[0].mxu0 %v399
        %v719 = vpop.f32.mrb[0].mxu0
        %v720 = vadd.f32 0.0, %v719
        %v721 = vpop.f32.mrb[0].mxu0
        %v722 = vpop.f32.mrb[0].mxu0
        %v723 = vadd.f32 0.0, %v722
        %v724 = vpop.f32.mrb[0].mxu0
        %725 = vmatprep.mubr.bf16.mxu0 0
        %726 = vmatmul.mubr.bf16.gmra.mrb[0].mxu0 %v402
        %v727 = vpop.f32.mrb[0].mxu0
        %v728 = vadd.f32 0.0, %v727
        %v729 = vpop.f32.mrb[0].mxu0
        %v730 = vpop.f32.mrb[0].mxu0
        %v731 = vadd.f32 0.0, %v730
        %v732 = vpop.f32.mrb[0].mxu0
        %733 = vmatprep.mubr.bf16.mxu0 0
        %734 = vmatmul.mubr.bf16.gmra.mrb[0].mxu0 %v405
        %v735 = vpop.f32.mrb[0].mxu0
        %v736 = vadd.f32 0.0, %v735
        %v737 = vpop.f32.mrb[0].mxu0
        %v738 = vpop.f32.mrb[0].mxu0
        %v739 = vadd.f32 0.0, %v738
        %v740 = vpop.f32.mrb[0].mxu0
        %741 = vmatprep.mubr.bf16.mxu0 0
        %742 = vmatmul.mubr.bf16.gmra.mrb[0].mxu0 %v408
        %v743 = vpop.f32.mrb[0].mxu0
        %v744 = vadd.f32 0.0, %v743
        %v745 = vpop.f32.mrb[0].mxu0
        %v746 = vpop.f32.mrb[0].mxu0
        %v747 = vadd.f32 0.0, %v746
        %v748 = vpop.f32.mrb[0].mxu0
        %749 = vmatprep.mubr.bf16.mxu0 0
        %750 = vmatmul.mubr.bf16.gmra.mrb[0].mxu0 %v411
        %v751 = vpop.f32.mrb[0].mxu0
        %v752 = vadd.f32 0.0, %v751
        %v753 = vpop.f32.mrb[0].mxu0
        %v754 = vpop.f32.mrb[0].mxu0
        %v755 = vadd.f32 0.0, %v754
        %v756 = vpop.f32.mrb[0].mxu0
        %757 = vmatprep.mubr.bf16.mxu0 0
        %758 = vmatmul.mubr.bf16.gmra.mrb[0].mxu0 %v414
        %v759 = vpop.f32.mrb[0].mxu0
        %v760 = vadd.f32 0.0, %v759
        %v761 = vpop.f32.mrb[0].mxu0
        %v762 = vpop.f32.mrb[0].mxu0
        %v763 = vadd.f32 0.0, %v762
        %v764 = vpop.f32.mrb[0].mxu0
        %765 = vmatprep.mubr.bf16.mxu0 0
        %766 = vmatmul.mubr.bf16.gmra.mrb[0].mxu0 %v417
        %v767 = vpop.f32.mrb[0].mxu0
        %v768 = vadd.f32 0.0, %v767
        %v769 = vpop.f32.mrb[0].mxu0
        %v770 = vpop.f32.mrb[0].mxu0
        %v771 = vadd.f32 0.0, %v770
        %v772 = vpop.f32.mrb[0].mxu0
        %773 = vdwg.mxu0
        %v774 = vrot.slane %v712, 2
        %v775 = vrot.slane %v715, 2
        %v776 = vrot.slane %v720, 2
        %v777 = vrot.slane %v723, 2
        %v778 = vrot.slane %v728, 2
        %v779 = vrot.slane %v731, 2
        %v780 = vrot.slane %v736, 2
        %v781 = vrot.slane %v739, 2
        %v782 = vrot.slane %v744, 2
        %v783 = vrot.slane %v747, 2
        %v784 = vrot.slane %v752, 2
        %v785 = vrot.slane %v755, 2
        %v786 = vrot.slane %v760, 2
        %v787 = vrot.slane %v763, 2
        %v788 = vrot.slane %v768, 2
        %v789 = vrot.slane %v771, 2
        %vm790 = vcmp.lt.s32.totalorder %v533, 6
        %v791 = vsel %vm790, %v788, %v789
        %v792 = vsel %vm790, %v787, %v788
        %v793 = vsel %vm790, %v786, %v787
        %v794 = vsel %vm790, %v785, %v786
        %v795 = vsel %vm790, %v784, %v785
        %v796 = vsel %vm790, %v783, %v784
        %v797 = vsel %vm790, %v782, %v783
        %v798 = vsel %vm790, %v781, %v782
        %v799 = vsel %vm790, %v780, %v781
        %v800 = vsel %vm790, %v779, %v780
        %v801 = vsel %vm790, %v778, %v779
        %v802 = vsel %vm790, %v777, %v778
        %v803 = vsel %vm790, %v776, %v777
        %v804 = vsel %vm790, %v775, %v776
        %v805 = vsel %vm790, %v774, %v775
        %v806 = vsel %vm790, %v789, %v774
        %v807 = vadd.f32 %v598, %v805
        %v808 = vadd.f32 %v601, %v804
        %v809 = vadd.f32 %v606, %v803
        %v810 = vadd.f32 %v609, %v802
        %v811 = vadd.f32 %v614, %v801
        %v812 = vadd.f32 %v617, %v800
        %v813 = vadd.f32 %v622, %v799
        %v814 = vadd.f32 %v625, %v798
        %v815 = vadd.f32 %v630, %v797
        %v816 = vadd.f32 %v633, %v796
        %v817 = vadd.f32 %v638, %v795
        %v818 = vadd.f32 %v641, %v794
        %v819 = vadd.f32 %v646, %v793
        %v820 = vadd.f32 %v649, %v792
        %v821 = vadd.f32 %v654, %v791
        %v822 = vadd.f32 %v657, %v806
        %s823 = scalar_lea.vmem [#allocation5], 48
        %v824 = vld [vmem:[%s823] sm:$0xf]
        %v825 = vld [vmem:[%s823 + $0x4] sm:$0xf]
        %v826 = vld [vmem:[%s823 + $0x8] sm:$0xf]
        %v827 = vld [vmem:[%s823 + $0xc] sm:$0xf]
        %v832 = vunpack.c.l.b16 %v824
        %v833 = vunpack.c.l.b16 %v825
        %v834 = vunpack.c.l.b16 %v826
        %v835 = vunpack.c.l.b16 %v827
        %v836 = vpack.c.b16 %v833, %v832
        %v837 = vpack.c.b16 %v835, %v834
        %840 = vmatprep.subr.bf16.mxu0 0
        %841 = vmatpush1.bf16.msra.mxu0 %v836
        %842 = vmatprep.subr.bf16.mxu0 0
        %843 = vmatpush1.bf16.msra.mxu0 %v837
        %844 = vmatprep.subr.bf16.mxu0 0
        %845 = vmatpush1.bf16.msra.mxu0 0
        %846 = vmatprep.subr.bf16.mxu0 0
        %847 = vmatpush1.bf16.msra.mxu0 0
        %848 = vmatprep.subr.bf16.mxu0 0
        %849 = vmatpush1.bf16.msra.mxu0 0
        %850 = vmatprep.subr.bf16.mxu0 0
        %851 = vmatpush1.bf16.msra.mxu0 0
        %852 = vmatprep.subr.bf16.mxu0 0
        %853 = vmatpush1.bf16.msra.mxu0 0
        %854 = vmatprep.subr.bf16.mxu0 0
        %855 = vmatpush1.bf16.msra.mxu0 0
        %856 = vmatprep.subr.bf16.mxu0 0
        %857 = vmatpush1.bf16.msra.mxu0 0
        %858 = vmatprep.subr.bf16.mxu0 0
        %859 = vmatpush1.bf16.msra.mxu0 0
        %860 = vmatprep.subr.bf16.mxu0 0
        %861 = vmatpush1.bf16.msra.mxu0 0
        %862 = vmatprep.subr.bf16.mxu0 0
        %863 = vmatpush1.bf16.msra.mxu0 0
        %864 = vmatprep.subr.bf16.mxu0 0
        %865 = vmatpush1.bf16.msra.mxu0 0
        %866 = vmatprep.subr.bf16.mxu0 0
        %867 = vmatpush1.bf16.msra.mxu0 0
        %868 = vmatprep.subr.bf16.mxu0 0
        %869 = vmatpush1.bf16.msra.mxu0 0
        %870 = vmatprep.subr.bf16.mxu0 0
        %871 = vmatpush1.bf16.msra.mxu0 0
        %872 = vmatprep.mubr.bf16.mxu0 0
        %873 = vmatmul.mubr.bf16.gmra.mrb[0].mxu0 %v396
        %v874 = vpop.f32.mrb[0].mxu0
        %v875 = vadd.f32 0.0, %v874
        %v876 = vpop.f32.mrb[0].mxu0
        %v877 = vpop.f32.mrb[0].mxu0
        %v878 = vadd.f32 0.0, %v877
        %v879 = vpop.f32.mrb[0].mxu0
        %880 = vmatprep.mubr.bf16.mxu0 0
        %881 = vmatmul.mubr.bf16.gmra.mrb[0].mxu0 %v399
        %v882 = vpop.f32.mrb[0].mxu0
        %v883 = vadd.f32 0.0, %v882
        %v884 = vpop.f32.mrb[0].mxu0
        %v885 = vpop.f32.mrb[0].mxu0
        %v886 = vadd.f32 0.0, %v885
        %v887 = vpop.f32.mrb[0].mxu0
        %888 = vmatprep.mubr.bf16.mxu0 0
        %889 = vmatmul.mubr.bf16.gmra.mrb[0].mxu0 %v402
        %v890 = vpop.f32.mrb[0].mxu0
        %v891 = vadd.f32 0.0, %v890
        %v892 = vpop.f32.mrb[0].mxu0
        %v893 = vpop.f32.mrb[0].mxu0
        %v894 = vadd.f32 0.0, %v893
        %v895 = vpop.f32.mrb[0].mxu0
        %896 = vmatprep.mubr.bf16.mxu0 0
        %897 = vmatmul.mubr.bf16.gmra.mrb[0].mxu0 %v405
        %v898 = vpop.f32.mrb[0].mxu0
        %v899 = vadd.f32 0.0, %v898
        %v900 = vpop.f32.mrb[0].mxu0
        %v901 = vpop.f32.mrb[0].mxu0
        %v902 = vadd.f32 0.0, %v901
        %v903 = vpop.f32.mrb[0].mxu0
        %904 = vmatprep.mubr.bf16.mxu0 0
        %905 = vmatmul.mubr.bf16.gmra.mrb[0].mxu0 %v408
        %v906 = vpop.f32.mrb[0].mxu0
        %v907 = vadd.f32 0.0, %v906
        %v908 = vpop.f32.mrb[0].mxu0
        %v909 = vpop.f32.mrb[0].mxu0
        %v910 = vadd.f32 0.0, %v909
        %v911 = vpop.f32.mrb[0].mxu0
        %912 = vmatprep.mubr.bf16.mxu0 0
        %913 = vmatmul.mubr.bf16.gmra.mrb[0].mxu0 %v411
        %v914 = vpop.f32.mrb[0].mxu0
        %v915 = vadd.f32 0.0, %v914
        %v916 = vpop.f32.mrb[0].mxu0
        %v917 = vpop.f32.mrb[0].mxu0
        %v918 = vadd.f32 0.0, %v917
        %v919 = vpop.f32.mrb[0].mxu0
        %920 = vmatprep.mubr.bf16.mxu0 0
        %921 = vmatmul.mubr.bf16.gmra.mrb[0].mxu0 %v414
        %v922 = vpop.f32.mrb[0].mxu0
        %v923 = vadd.f32 0.0, %v922
        %v924 = vpop.f32.mrb[0].mxu0
        %v925 = vpop.f32.mrb[0].mxu0
        %v926 = vadd.f32 0.0, %v925
        %v927 = vpop.f32.mrb[0].mxu0
        %928 = vmatprep.mubr.bf16.mxu0 0
        %929 = vmatmul.mubr.bf16.gmra.mrb[0].mxu0 %v417
        %v930 = vpop.f32.mrb[0].mxu0
        %v931 = vadd.f32 0.0, %v930
        %v932 = vpop.f32.mrb[0].mxu0
        %v933 = vpop.f32.mrb[0].mxu0
        %v934 = vadd.f32 0.0, %v933
        %v935 = vpop.f32.mrb[0].mxu0
        %936 = vdwg.mxu0
        %v937 = vrot.slane %v875, 3
        %v938 = vrot.slane %v878, 3
        %v939 = vrot.slane %v883, 3
        %v940 = vrot.slane %v886, 3
        %v941 = vrot.slane %v891, 3
        %v942 = vrot.slane %v894, 3
        %v943 = vrot.slane %v899, 3
        %v944 = vrot.slane %v902, 3
        %v945 = vrot.slane %v907, 3
        %v946 = vrot.slane %v910, 3
        %v947 = vrot.slane %v915, 3
        %v948 = vrot.slane %v918, 3
        %v949 = vrot.slane %v923, 3
        %v950 = vrot.slane %v926, 3
        %v951 = vrot.slane %v931, 3
        %v952 = vrot.slane %v934, 3
        %vm953 = vcmp.lt.s32.totalorder %v533, 5
        %v954 = vsel %vm953, %v951, %v952
        %v955 = vsel %vm953, %v950, %v951
        %v956 = vsel %vm953, %v949, %v950
        %v957 = vsel %vm953, %v948, %v949
        %v958 = vsel %vm953, %v947, %v948
        %v959 = vsel %vm953, %v946, %v947
        %v960 = vsel %vm953, %v945, %v946
        %v961 = vsel %vm953, %v944, %v945
        %v962 = vsel %vm953, %v943, %v944
        %v963 = vsel %vm953, %v942, %v943
        %v964 = vsel %vm953, %v941, %v942
        %v965 = vsel %vm953, %v940, %v941
        %v966 = vsel %vm953, %v939, %v940
        %v967 = vsel %vm953, %v938, %v939
        %v968 = vsel %vm953, %v937, %v938
        %v969 = vsel %vm953, %v952, %v937
        %v970 = vadd.f32 %v807, %v968
        %v971 = vadd.f32 %v808, %v967
        %v972 = vadd.f32 %v809, %v966
        %v973 = vadd.f32 %v810, %v965
        %v974 = vadd.f32 %v811, %v964
        %v975 = vadd.f32 %v812, %v963
        %v976 = vadd.f32 %v813, %v962
        %v977 = vadd.f32 %v814, %v961
        %v978 = vadd.f32 %v815, %v960
        %v979 = vadd.f32 %v816, %v959
        %v980 = vadd.f32 %v817, %v958
        %v981 = vadd.f32 %v818, %v957
        %v982 = vadd.f32 %v819, %v956
        %v983 = vadd.f32 %v820, %v955
        %v984 = vadd.f32 %v821, %v954
        %v985 = vadd.f32 %v822, %v969
        %s986 = scalar_lea.vmem [#allocation5], 64
        %v987 = vld [vmem:[%s986] sm:$0xf]
        %v988 = vld [vmem:[%s986 + $0x4] sm:$0xf]
        %v989 = vld [vmem:[%s986 + $0x8] sm:$0xf]
        %v990 = vld [vmem:[%s986 + $0xc] sm:$0xf]
        %v995 = vunpack.c.l.b16 %v987
        %v996 = vunpack.c.l.b16 %v988
        %v997 = vunpack.c.l.b16 %v989
        %v998 = vunpack.c.l.b16 %v990
        %v999 = vpack.c.b16 %v996, %v995
        %v1000 = vpack.c.b16 %v998, %v997
        %1003 = vmatprep.subr.bf16.mxu0 0
        %1004 = vmatpush1.bf16.msra.mxu0 %v999
        %1005 = vmatprep.subr.bf16.mxu0 0
        %1006 = vmatpush1.bf16.msra.mxu0 %v1000
        %1007 = vmatprep.subr.bf16.mxu0 0
        %1008 = vmatpush1.bf16.msra.mxu0 0
        %1009 = vmatprep.subr.bf16.mxu0 0
        %1010 = vmatpush1.bf16.msra.mxu0 0
        %1011 = vmatprep.subr.bf16.mxu0 0
        %1012 = vmatpush1.bf16.msra.mxu0 0
        %1013 = vmatprep.subr.bf16.mxu0 0
        %1014 = vmatpush1.bf16.msra.mxu0 0
        %1015 = vmatprep.subr.bf16.mxu0 0
        %1016 = vmatpush1.bf16.msra.mxu0 0
        %1017 = vmatprep.subr.bf16.mxu0 0
        %1018 = vmatpush1.bf16.msra.mxu0 0
        %1019 = vmatprep.subr.bf16.mxu0 0
        %1020 = vmatpush1.bf16.msra.mxu0 0
        %1021 = vmatprep.subr.bf16.mxu0 0
        %1022 = vmatpush1.bf16.msra.mxu0 0
        %1023 = vmatprep.subr.bf16.mxu0 0
        %1024 = vmatpush1.bf16.msra.mxu0 0
        %1025 = vmatprep.subr.bf16.mxu0 0
        %1026 = vmatpush1.bf16.msra.mxu0 0
        %1027 = vmatprep.subr.bf16.mxu0 0
        %1028 = vmatpush1.bf16.msra.mxu0 0
        %1029 = vmatprep.subr.bf16.mxu0 0
        %1030 = vmatpush1.bf16.msra.mxu0 0
        %1031 = vmatprep.subr.bf16.mxu0 0
        %1032 = vmatpush1.bf16.msra.mxu0 0
        %1033 = vmatprep.subr.bf16.mxu0 0
        %1034 = vmatpush1.bf16.msra.mxu0 0
        %1035 = vmatprep.mubr.bf16.mxu0 0
        %1036 = vmatmul.mubr.bf16.gmra.mrb[0].mxu0 %v396
        %v1037 = vpop.f32.mrb[0].mxu0
        %v1038 = vadd.f32 0.0, %v1037
        %v1039 = vpop.f32.mrb[0].mxu0
        %v1040 = vpop.f32.mrb[0].mxu0
        %v1041 = vadd.f32 0.0, %v1040
        %v1042 = vpop.f32.mrb[0].mxu0
        %1043 = vmatprep.mubr.bf16.mxu0 0
        %1044 = vmatmul.mubr.bf16.gmra.mrb[0].mxu0 %v399
        %v1045 = vpop.f32.mrb[0].mxu0
        %v1046 = vadd.f32 0.0, %v1045
        %v1047 = vpop.f32.mrb[0].mxu0
        %v1048 = vpop.f32.mrb[0].mxu0
        %v1049 = vadd.f32 0.0, %v1048
        %v1050 = vpop.f32.mrb[0].mxu0
        %1051 = vmatprep.mubr.bf16.mxu0 0
        %1052 = vmatmul.mubr.bf16.gmra.mrb[0].mxu0 %v402
        %v1053 = vpop.f32.mrb[0].mxu0
        %v1054 = vadd.f32 0.0, %v1053
        %v1055 = vpop.f32.mrb[0].mxu0
        %v1056 = vpop.f32.mrb[0].mxu0
        %v1057 = vadd.f32 0.0, %v1056
        %v1058 = vpop.f32.mrb[0].mxu0
        %1059 = vmatprep.mubr.bf16.mxu0 0
        %1060 = vmatmul.mubr.bf16.gmra.mrb[0].mxu0 %v405
        %v1061 = vpop.f32.mrb[0].mxu0
        %v1062 = vadd.f32 0.0, %v1061
        %v1063 = vpop.f32.mrb[0].mxu0
        %v1064 = vpop.f32.mrb[0].mxu0
        %v1065 = vadd.f32 0.0, %v1064
        %v1066 = vpop.f32.mrb[0].mxu0
        %1067 = vmatprep.mubr.bf16.mxu0 0
        %1068 = vmatmul.mubr.bf16.gmra.mrb[0].mxu0 %v408
        %v1069 = vpop.f32.mrb[0].mxu0
        %v1070 = vadd.f32 0.0, %v1069
        %v1071 = vpop.f32.mrb[0].mxu0
        %v1072 = vpop.f32.mrb[0].mxu0
        %v1073 = vadd.f32 0.0, %v1072
        %v1074 = vpop.f32.mrb[0].mxu0
        %1075 = vmatprep.mubr.bf16.mxu0 0
        %1076 = vmatmul.mubr.bf16.gmra.mrb[0].mxu0 %v411
        %v1077 = vpop.f32.mrb[0].mxu0
        %v1078 = vadd.f32 0.0, %v1077
        %v1079 = vpop.f32.mrb[0].mxu0
        %v1080 = vpop.f32.mrb[0].mxu0
        %v1081 = vadd.f32 0.0, %v1080
        %v1082 = vpop.f32.mrb[0].mxu0
        %1083 = vmatprep.mubr.bf16.mxu0 0
        %1084 = vmatmul.mubr.bf16.gmra.mrb[0].mxu0 %v414
        %v1085 = vpop.f32.mrb[0].mxu0
        %v1086 = vadd.f32 0.0, %v1085
        %v1087 = vpop.f32.mrb[0].mxu0
        %v1088 = vpop.f32.mrb[0].mxu0
        %v1089 = vadd.f32 0.0, %v1088
        %v1090 = vpop.f32.mrb[0].mxu0
        %1091 = vmatprep.mubr.bf16.mxu0 0
        %1092 = vmatmul.mubr.bf16.gmra.mrb[0].mxu0 %v417
        %v1093 = vpop.f32.mrb[0].mxu0
        %v1094 = vadd.f32 0.0, %v1093
        %v1095 = vpop.f32.mrb[0].mxu0
        %v1096 = vpop.f32.mrb[0].mxu0
        %v1097 = vadd.f32 0.0, %v1096
        %v1098 = vpop.f32.mrb[0].mxu0
        %1099 = vdwg.mxu0
        %v1100 = vrot.slane %v1038, 4
        %v1101 = vrot.slane %v1041, 4
        %v1102 = vrot.slane %v1046, 4
        %v1103 = vrot.slane %v1049, 4
        %v1104 = vrot.slane %v1054, 4
        %v1105 = vrot.slane %v1057, 4
        %v1106 = vrot.slane %v1062, 4
        %v1107 = vrot.slane %v1065, 4
        %v1108 = vrot.slane %v1070, 4
        %v1109 = vrot.slane %v1073, 4
        %v1110 = vrot.slane %v1078, 4
        %v1111 = vrot.slane %v1081, 4
        %v1112 = vrot.slane %v1086, 4
        %v1113 = vrot.slane %v1089, 4
        %v1114 = vrot.slane %v1094, 4
        %v1115 = vrot.slane %v1097, 4
        %vm1116 = vcmp.lt.s32.totalorder %v533, 4
        %v1117 = vsel %vm1116, %v1114, %v1115
        %v1118 = vsel %vm1116, %v1113, %v1114
        %v1119 = vsel %vm1116, %v1112, %v1113
        %v1120 = vsel %vm1116, %v1111, %v1112
        %v1121 = vsel %vm1116, %v1110, %v1111
        %v1122 = vsel %vm1116, %v1109, %v1110
        %v1123 = vsel %vm1116, %v1108, %v1109
        %v1124 = vsel %vm1116, %v1107, %v1108
        %v1125 = vsel %vm1116, %v1106, %v1107
        %v1126 = vsel %vm1116, %v1105, %v1106
        %v1127 = vsel %vm1116, %v1104, %v1105
        %v1128 = vsel %vm1116, %v1103, %v1104
        %v1129 = vsel %vm1116, %v1102, %v1103
        %v1130 = vsel %vm1116, %v1101, %v1102
        %v1131 = vsel %vm1116, %v1100, %v1101
        %v1132 = vsel %vm1116, %v1115, %v1100
        %v1133 = vadd.f32 %v970, %v1131
        %v1134 = vadd.f32 %v971, %v1130
        %v1135 = vadd.f32 %v972, %v1129
        %v1136 = vadd.f32 %v973, %v1128
        %v1137 = vadd.f32 %v974, %v1127
        %v1138 = vadd.f32 %v975, %v1126
        %v1139 = vadd.f32 %v976, %v1125
        %v1140 = vadd.f32 %v977, %v1124
        %v1141 = vadd.f32 %v978, %v1123
        %v1142 = vadd.f32 %v979, %v1122
        %v1143 = vadd.f32 %v980, %v1121
        %v1144 = vadd.f32 %v981, %v1120
        %v1145 = vadd.f32 %v982, %v1119
        %v1146 = vadd.f32 %v983, %v1118
        %v1147 = vadd.f32 %v984, %v1117
        %v1148 = vadd.f32 %v985, %v1132
        %v1149 = vld [vmem:[%s2] sm:$0x1]
        %v1151 = vlaneseq
        %v1152 = vshrl.u32 %v1151, 7
        %v1153 = vsub.s32 0, %v1152
        %v1154 = vrot.slane %v1149, %v1153
        %v1156 = vadd.f32 %v1133, %v1154
        %v1157 = vadd.f32 %v1134, %v1154
        %v1158 = vadd.f32 %v1135, %v1154
        %v1159 = vadd.f32 %v1136, %v1154
        %v1160 = vadd.f32 %v1137, %v1154
        %v1161 = vadd.f32 %v1138, %v1154
        %v1162 = vadd.f32 %v1139, %v1154
        %v1163 = vadd.f32 %v1140, %v1154
        %v1164 = vadd.f32 %v1141, %v1154
        %v1165 = vadd.f32 %v1142, %v1154
        %v1166 = vadd.f32 %v1143, %v1154
        %v1167 = vadd.f32 %v1144, %v1154
        %v1168 = vadd.f32 %v1145, %v1154
        %v1169 = vadd.f32 %v1146, %v1154
        %v1170 = vadd.f32 %v1147, %v1154
        %v1171 = vadd.f32 %v1148, %v1154
        %v1172 = vmax.f32 %v1156, 0.0
        %v1173 = vmax.f32 %v1157, 0.0
        %v1174 = vmax.f32 %v1158, 0.0
        %v1175 = vmax.f32 %v1159, 0.0
        %v1176 = vmax.f32 %v1160, 0.0
        %v1177 = vmax.f32 %v1161, 0.0
        %v1178 = vmax.f32 %v1162, 0.0
        %v1179 = vmax.f32 %v1163, 0.0
        %v1180 = vmax.f32 %v1164, 0.0
        %v1181 = vmax.f32 %v1165, 0.0
        %v1182 = vmax.f32 %v1166, 0.0
        %v1183 = vmax.f32 %v1167, 0.0
        %v1184 = vmax.f32 %v1168, 0.0
        %v1185 = vmax.f32 %v1169, 0.0
        %v1186 = vmax.f32 %v1170, 0.0
        %v1187 = vmax.f32 %v1171, 0.0
        %v1188 = vld [vmem:[#allocation7] sm:$0xff]
        %v1189 = vld [vmem:[#allocation7 + $0x8] sm:$0xff]
        %v1190 = vmul.f32 %v1172, %v1188
        %v1191 = vmul.f32 %v1173, %v1189
        %v1192 = vmul.f32 %v1174, %v1188
        %v1193 = vmul.f32 %v1175, %v1189
        %v1194 = vmul.f32 %v1176, %v1188
        %v1195 = vmul.f32 %v1177, %v1189
        %v1196 = vmul.f32 %v1178, %v1188
        %v1197 = vmul.f32 %v1179, %v1189
        %v1198 = vmul.f32 %v1180, %v1188
        %v1199 = vmul.f32 %v1181, %v1189
        %v1200 = vmul.f32 %v1182, %v1188
        %v1201 = vmul.f32 %v1183, %v1189
        %v1202 = vmul.f32 %v1184, %v1188
        %v1203 = vmul.f32 %v1185, %v1189
        %v1204 = vmul.f32 %v1186, %v1188
        %v1205 = vmul.f32 %v1187, %v1189
        %v1206 = vmax.f32 %v1190, %v1191
        %v1207 = vrot.slane %v1206, 4
        %v1208 = vmax.f32 %v1206, %v1207
        %v1209 = vrot.slane %v1208, 2
        %v1210 = vmax.f32 %v1208, %v1209
        %v1211 = vrot.slane %v1210, 1
        %v1212 = vmax.f32 %v1210, %v1211
        %v1213 = vmax.f32 %v1192, %v1193
        %v1214 = vrot.slane %v1213, 4
        %v1215 = vmax.f32 %v1213, %v1214
        %v1216 = vrot.slane %v1215, 2
        %v1217 = vmax.f32 %v1215, %v1216
        %v1218 = vrot.slane %v1217, 1
        %v1219 = vmax.f32 %v1217, %v1218
        %v1220 = vmax.f32 %v1194, %v1195
        %v1221 = vrot.slane %v1220, 4
        %v1222 = vmax.f32 %v1220, %v1221
        %v1223 = vrot.slane %v1222, 2
        %v1224 = vmax.f32 %v1222, %v1223
        %v1225 = vrot.slane %v1224, 1
        %v1226 = vmax.f32 %v1224, %v1225
        %v1227 = vmax.f32 %v1196, %v1197
        %v1228 = vrot.slane %v1227, 4
        %v1229 = vmax.f32 %v1227, %v1228
        %v1230 = vrot.slane %v1229, 2
        %v1231 = vmax.f32 %v1229, %v1230
        %v1232 = vrot.slane %v1231, 1
        %v1233 = vmax.f32 %v1231, %v1232
        %v1234 = vmax.f32 %v1198, %v1199
        %v1235 = vrot.slane %v1234, 4
        %v1236 = vmax.f32 %v1234, %v1235
        %v1237 = vrot.slane %v1236, 2
        %v1238 = vmax.f32 %v1236, %v1237
        %v1239 = vrot.slane %v1238, 1
        %v1240 = vmax.f32 %v1238, %v1239
        %v1241 = vmax.f32 %v1200, %v1201
        %v1242 = vrot.slane %v1241, 4
        %v1243 = vmax.f32 %v1241, %v1242
        %v1244 = vrot.slane %v1243, 2
        %v1245 = vmax.f32 %v1243, %v1244
        %v1246 = vrot.slane %v1245, 1
        %v1247 = vmax.f32 %v1245, %v1246
        %v1248 = vmax.f32 %v1202, %v1203
        %v1249 = vrot.slane %v1248, 4
        %v1250 = vmax.f32 %v1248, %v1249
        %v1251 = vrot.slane %v1250, 2
        %v1252 = vmax.f32 %v1250, %v1251
        %v1253 = vrot.slane %v1252, 1
        %v1254 = vmax.f32 %v1252, %v1253
        %v1255 = vmax.f32 %v1204, %v1205
        %v1256 = vrot.slane %v1255, 4
        %v1257 = vmax.f32 %v1255, %v1256
        %v1258 = vrot.slane %v1257, 2
        %v1259 = vmax.f32 %v1257, %v1258
        %v1260 = vrot.slane %v1259, 1
        %v1261 = vmax.f32 %v1259, %v1260
        %v1262 = vld [vmem:[#allocation8] sm:$0xff]
        %v1263 = vld [vmem:[#allocation8 + $0x8] sm:$0xff]
        %v1264 = vld [vmem:[#allocation8 + $0x10] sm:$0xff]
        %v1265 = vld [vmem:[#allocation8 + $0x18] sm:$0xff]
        %v1266 = vld [vmem:[#allocation8 + $0x20] sm:$0xff]
        %v1267 = vld [vmem:[#allocation8 + $0x28] sm:$0xff]
        %v1268 = vld [vmem:[#allocation8 + $0x30] sm:$0xff]
        %v1269 = vld [vmem:[#allocation8 + $0x38] sm:$0xff]
        %v1270 = vld [vmem:[#allocation8 + $0x40] sm:$0xff]
        %v1271 = vld [vmem:[#allocation8 + $0x48] sm:$0xff]
        %v1272 = vld [vmem:[#allocation8 + $0x50] sm:$0xff]
        %v1273 = vld [vmem:[#allocation8 + $0x58] sm:$0xff]
        %v1274 = vld [vmem:[#allocation8 + $0x60] sm:$0xff]
        %v1275 = vld [vmem:[#allocation8 + $0x68] sm:$0xff]
        %v1276 = vld [vmem:[#allocation8 + $0x70] sm:$0xff]
        %v1277 = vld [vmem:[#allocation8 + $0x78] sm:$0xff]
        %v1278 = vld [vmem:[%s5] sm:$0x1]
        %v1280 = vlaneseq
        %v1281 = vshrl.u32 %v1280, 7
        %v1282 = vsub.s32 0, %v1281
        %v1283 = vrot.slane %v1278, %v1282
        %vm1293 = vcmask 1041409
        %v1294 = vsel %vm1293, %v1219, %v1212
        %vm1295 = vcmask 1042434
        %v1296 = vsel %vm1295, %v1226, %v1294
        %vm1297 = vcmask 1043459
        %v1298 = vsel %vm1297, %v1233, %v1296
        %vm1299 = vcmask 1044484
        %v1300 = vsel %vm1299, %v1240, %v1298
        %vm1301 = vcmask 1045509
        %v1302 = vsel %vm1301, %v1247, %v1300
        %vm1303 = vcmask 1046534
        %v1304 = vsel %vm1303, %v1254, %v1302
        %vm1305 = vcmask 1047559
        %v1306 = vsel %vm1305, %v1261, %v1304
        %1308 = vmatprep.subr.mxu0 0.0
        %1309 = vmatpush1.msra.mxu0 %v1262
        %1310 = vmatprep.subr.mxu0 0.0
        %1311 = vmatpush1.msra.mxu0 %v1263
        %1312 = vmatprep.subr.mxu0 0.0
        %1313 = vmatpush1.msra.mxu0 %v1264
        %1314 = vmatprep.subr.mxu0 0.0
        %1315 = vmatpush1.msra.mxu0 %v1265
        %1316 = vmatprep.subr.mxu0 0.0
        %1317 = vmatpush1.msra.mxu0 %v1266
        %1318 = vmatprep.subr.mxu0 0.0
        %1319 = vmatpush1.msra.mxu0 %v1267
        %1320 = vmatprep.subr.mxu0 0.0
        %1321 = vmatpush1.msra.mxu0 %v1268
        %1322 = vmatprep.subr.mxu0 0.0
        %1323 = vmatpush1.msra.mxu0 %v1269
        %1324 = vmatprep.subr.mxu0 0.0
        %1325 = vmatpush1.msra.mxu0 %v1270
        %1326 = vmatprep.subr.mxu0 0.0
        %1327 = vmatpush1.msra.mxu0 %v1271
        %1328 = vmatprep.subr.mxu0 0.0
        %1329 = vmatpush1.msra.mxu0 %v1272
        %1330 = vmatprep.subr.mxu0 0.0
        %1331 = vmatpush1.msra.mxu0 %v1273
        %1332 = vmatprep.subr.mxu0 0.0
        %1333 = vmatpush1.msra.mxu0 %v1274
        %1334 = vmatprep.subr.mxu0 0.0
        %1335 = vmatpush1.msra.mxu0 %v1275
        %1336 = vmatprep.subr.mxu0 0.0
        %1337 = vmatpush1.msra.mxu0 %v1276
        %1338 = vmatprep.subr.mxu0 0.0
        %1339 = vmatpush1.msra.mxu0 %v1277
        %1340 = vmatprep.subr.mxu0 0.0
        %1341 = vmatpush1.msra.mxu0 0.0
        %1342 = vmatprep.subr.mxu0 0.0
        %1343 = vmatpush1.msra.mxu0 0.0
        %1344 = vmatprep.subr.mxu0 0.0
        %1345 = vmatpush1.msra.mxu0 0.0
        %1346 = vmatprep.subr.mxu0 0.0
        %1347 = vmatpush1.msra.mxu0 0.0
        %1348 = vmatprep.subr.mxu0 0.0
        %1349 = vmatpush1.msra.mxu0 0.0
        %1350 = vmatprep.subr.mxu0 0.0
        %1351 = vmatpush1.msra.mxu0 0.0
        %1352 = vmatprep.subr.mxu0 0.0
        %1353 = vmatpush1.msra.mxu0 0.0
        %1354 = vmatprep.subr.mxu0 0.0
        %1355 = vmatpush1.msra.mxu0 0.0
        %1356 = vmatprep.subr.mxu0 0.0
        %1357 = vmatpush1.msra.mxu0 0.0
        %1358 = vmatprep.subr.mxu0 0.0
        %1359 = vmatpush1.msra.mxu0 0.0
        %1360 = vmatprep.subr.mxu0 0.0
        %1361 = vmatpush1.msra.mxu0 0.0
        %1362 = vmatprep.subr.mxu0 0.0
        %1363 = vmatpush1.msra.mxu0 0.0
        %1364 = vmatprep.subr.mxu0 0.0
        %1365 = vmatpush1.msra.mxu0 0.0
        %1366 = vmatprep.subr.mxu0 0.0
        %1367 = vmatpush1.msra.mxu0 0.0
        %1368 = vmatprep.subr.mxu0 0.0
        %1369 = vmatpush1.msra.mxu0 0.0
        %1370 = vmatprep.subr.mxu0 0.0
        %1371 = vmatpush1.msra.mxu0 0.0
        %1372 = vmatprep.mubr.f32.mxu0 0.0
        %1373 = vmatmul.mubr.f32.gmra.mrb[0].mxu0 %v1306
        %v1374 = vpop.f32.mrb[0].mxu0
        %v1375 = vadd.f32 %v1283, %v1374
        %v1376 = vpop.f32.mrb[0].mxu0
        %1377 = vdwg.mxu0
        %1378 = vst [vmem:[%s314] sm:$0xff] %v1375
        %s1379 = sand.u32 %s164, 1
        %s1380 = scalar_lea.sflag [#allocation4], %s1379
        %s1381 = sand.u32 %s164, 1
        %s1382 = smul.addr %s1381, 8
        %s1383 = scalar_lea.vmem [#allocation10], %s1382
        // Predicated region
        $region61: #{tpu_custom_call.1} parent=43 // pred_check
          %p1384 = pneg %p174
        $region62: #{tpu_custom_call.1} parent=43 // pred_check_branch
          %1386 = sbr.rel (%p1384) target = $region64
        $region63: #{tpu_custom_call.1} parent=43 // pred_region
          %s1388 = ssub.s32 128, 128
          %1389 = vsyncadd %s1380, %s1388
          %s1390 = smul.addr %s25, 128
          %s1391 = scalar_lea.hbm %s6, %s1390
          %s1393 = sshll.u32 %s1383, 4
          %s1394 = int_to_ptr.vmem [resolvable:$true] %s1393
          %1396 = dma.vmem_to_hbm [thread:$0]  %s1394, 128, %s1391, %s1380
        $region64: #{tpu_custom_call.1} parent=43 // pred_fallthru
          _
      $region44: #{tpu_custom_call.1} parent=5 // pred_fallthru
        _
      %p1397 = scmp.le.s32.totalorder 2, %s20
      // Predicated region
      $region65: #{tpu_custom_call.1} parent=5 // pred_check
        %p1398 = pneg %p1397
      $region66: #{tpu_custom_call.1} parent=5 // pred_check_branch
        %1400 = sbr.rel (%p1398) target = $region68
      $region67: #{tpu_custom_call.1} parent=5 // pred_region
        %s1401 = ssub.s32 %s20, 2
        // Predicated region
        $region69: #{tpu_custom_call.1} parent=67 // pred_check
          %p1402 = pneg %p180
        $region70: #{tpu_custom_call.1} parent=67 // pred_check_branch
          %1404 = sbr.rel (%p1402) target = $region72
        $region71: #{tpu_custom_call.1} parent=67 // pred_region
          %s1405 = sand.u32 %s165, 1
          %s1406 = scalar_lea.sflag [#allocation4], %s1405
          %s1407 = sand.u32 %s165, 1
          %s1408 = smul.addr %s1407, 8
          %s1409 = scalar_lea.vmem [#allocation10], %s1408
          %1410 = dma.done %s1406, 128
        $region72: #{tpu_custom_call.1} parent=67 // pred_fallthru
          _
      $region68: #{tpu_custom_call.1} parent=5 // pred_fallthru
        _
    $region6: #{tpu_custom_call.1} parent=1 // loop_footer
      %s24 = sadd.s32 1, %s20
    $region7: #{tpu_custom_call.1} parent=1 // loop_footer_branch
      %19 = sbr.rel target = $region3
    $region8: #{tpu_custom_call.1} parent=1 // loop_exit
      _
    %1411 = vsyncpa [#allocation3], 1
    %s1412 = scalar_lea.sflag [#allocation3], 1
    %1413 = vsyncpa %s1412, 1
    %1414 = vsyncpa [#allocation6], 1
    %1415 = vsyncpa [#allocation9], 1
    %1416 = vsyncpa [#allocation4], 1
    %s1417 = scalar_lea.sflag [#allocation4], 1
    %1418 = vsyncpa %s1417, 1

</llo_original>
